<compile_context>
chip_gen: v5e
topology: v5e:2x2
jax: 0.10.0
libtpu: 0.0.40
codegen_flags: <defaults>
</compile_context>

<pallas_src>
import functools
import math

import jax
import jax.numpy as jnp
from jax.experimental import pallas as pl
from jax.experimental.pallas import tpu as pltpu


# ----------------------------- fused kernels -----------------------------

def _layernorm(z, g, b, eps):
    """One-pass LayerNorm over the last dim (f32 statistics)."""
    mean = jnp.mean(z, axis=-1, keepdims=True)
    var = jnp.mean(z * z, axis=-1, keepdims=True) - mean * mean
    return (z - mean) * jax.lax.rsqrt(var + eps) * g + b


def _mha_kernel(*refs, h, d_k, d_v, scale, eps, has_pos, has_mask):
    """Fused self-attention block for one batch element.

    refs (in order):
      x:(1,T,D) [, pos:(1,T,D)] [, mask_add:(1,1,T)],
      wqk:(D,2*h*d_k) bf16, bqk:(1,2*h*d_k), wv:(D,h*d_v) bf16, bv:(1,h*d_v),
      wo:(h*d_v,D) bf16, bo:(1,D), ln_g:(1,D), ln_b:(1,D), o:(1,T,D)
    """
    idx = 0
    x_ref = refs[idx]; idx += 1
    pos_ref = None
    if has_pos:
        pos_ref = refs[idx]; idx += 1
    mask_ref = None
    if has_mask:
        mask_ref = refs[idx]; idx += 1
    (wqk_ref, bqk_ref, wv_ref, bv_ref,
     wo_ref, bo_ref, g_ref, b_ref, o_ref) = refs[idx:]

    bf16, f32 = jnp.bfloat16, jnp.float32

    x = x_ref[0].astype(f32)                                         # [T, D]
    qk_in = x + pos_ref[0].astype(f32) if has_pos else x             # queries == keys source

    # Q and K projections share the pos-added input -> one concatenated matmul.
    qk = jnp.dot(qk_in.astype(bf16), wqk_ref[...],
                 preferred_element_type=f32) + bqk_ref[...]          # [T, 2*h*d_k]
    v = jnp.dot(x.astype(bf16), wv_ref[...],
                preferred_element_type=f32) + bv_ref[...]            # [T, h*d_v]

    hqk = h * d_k
    mask = mask_ref[0].astype(f32) if has_mask else None             # [1, T] additive

    heads = []
    for i in range(h):   # static unrolled loop; everything stays in VMEM
        qh = qk[:, i * d_k:(i + 1) * d_k]                            # [T, d_k]
        kh = qk[:, hqk + i * d_k:hqk + (i + 1) * d_k]                # [T, d_k]
        vh = v[:, i * d_v:(i + 1) * d_v]                             # [T, d_v]
        s = jnp.einsum("qd,kd->qk", qh.astype(bf16), kh.astype(bf16),
                       preferred_element_type=f32) * scale           # [T, T] f32
        if has_mask:
            s = s + mask                                             # broadcast over queries
        s = s - jnp.max(s, axis=-1, keepdims=True)
        p = jnp.exp(s)
        p = p * pl.reciprocal(jnp.sum(p, axis=-1, keepdims=True), approx=True)
        heads.append(jnp.einsum("qk,kd->qd", p.astype(bf16), vh.astype(bf16),
                                preferred_element_type=f32))         # [T, d_v]
    att = jnp.concatenate(heads, axis=-1)                            # [T, h*d_v]

    out = jnp.dot(att.astype(bf16), wo_ref[...],
                  preferred_element_type=f32) + bo_ref[...]          # [T, D]

    # Residual is against the pos-added queries, exactly as in the PyTorch module.
    z = qk_in + out
    o_ref[0] = _layernorm(z, g_ref[...], b_ref[...], eps).astype(o_ref.dtype)


def _ffn_kernel(x_ref, w1_ref, b1_ref, w2_ref, b2_ref, g_ref, b_ref, o_ref, *, eps):
    """o = LayerNorm(x + fc2(relu(fc1(x))))   x:(tm,D)  w1:(D,F) bf16  w2:(F,D) bf16."""
    bf16, f32 = jnp.bfloat16, jnp.float32
    x = x_ref[...].astype(f32)
    hdn = jnp.dot(x.astype(bf16), w1_ref[...], preferred_element_type=f32) + b1_ref[...]
    hdn = jnp.maximum(hdn, 0.0)
    y = jnp.dot(hdn.astype(bf16), w2_ref[...], preferred_element_type=f32) + b2_ref[...]
    o_ref[...] = _layernorm(x + y, g_ref[...], b_ref[...], eps).astype(o_ref.dtype)


# ----------------------------- pallas_call wrappers -----------------------------

_PARALLEL = pltpu.CompilerParams(dimension_semantics=("parallel",))


def fused_self_attention_block(p, x, pos, mask_add, *, h, d_k, d_v, eps=1e-5):
    B, T, D = x.shape
    has_pos = pos is not None
    has_mask = mask_add is not None

    tok_spec = pl.BlockSpec((1, T, D), lambda b: (b, 0, 0))
    inputs, in_specs = [x], [tok_spec]
    if has_pos:
        inputs.append(pos)
        in_specs.append(tok_spec)
    if has_mask:
        inputs.append(mask_add)                                   # [B, 1, T] additive f32
        in_specs.append(pl.BlockSpec((1, 1, T), lambda b: (b, 0, 0)))

    weights = [p["wqk"], p["bqk"], p["wv"], p["bv"], p["wo"], p["bo"], p["ln_g"], p["ln_b"]]
    inputs += weights
    in_specs += [pl.BlockSpec(w.shape, lambda b: (0, 0)) for w in weights]  # VMEM-resident

    kernel = functools.partial(_mha_kernel, h=h, d_k=d_k, d_v=d_v,
                               scale=1.0 / math.sqrt(d_k), eps=eps,
                               has_pos=has_pos, has_mask=has_mask)
    return pl.pallas_call(
        kernel,
        out_shape=jax.ShapeDtypeStruct((B, T, D), x.dtype),
        grid=(B,),
        in_specs=in_specs,
        out_specs=tok_spec,
        compiler_params=_PARALLEL,
    )(*inputs)


def fused_ffn_block(p, x, *, eps=1e-5):
    B, T, D = x.shape
    M = B * T
    tm = M
    for cand in (512, 256, 128, 64, 32, 16, 8):   # largest token tile that divides M
        if M % cand == 0:
            tm = cand
            break
    F = p["w1"].shape[1]
    const2 = lambda i: (0, 0)
    out = pl.pallas_call(
        functools.partial(_ffn_kernel, eps=eps),
        out_shape=jax.ShapeDtypeStruct((M, D), x.dtype),
        grid=(M // tm,),
        in_specs=[pl.BlockSpec((tm, D), lambda i: (i, 0)),
                  pl.BlockSpec((D, F), const2),
                  pl.BlockSpec((1, F), const2),
                  pl.BlockSpec((F, D), const2),
                  pl.BlockSpec((1, D), const2),
                  pl.BlockSpec((1, D), const2),
                  pl.BlockSpec((1, D), const2)],
        out_specs=pl.BlockSpec((tm, D), lambda i: (i, 0)),
        compiler_params=_PARALLEL,
    )(x.reshape(M, D), p["w1"], p["b1"], p["w2"], p["b2"], p["ln_g"], p["ln_b"])
    return out.reshape(B, T, D)


def encoder_layer_forward(params, queries, keys, values, attention_mask=None,
                          attention_weights=None, pos=None, *, h, d_k, d_v):
    """Pallas forward of EncoderLayer (eval mode).

    Specialized to the self-attention configuration the DETR encoder uses
    (queries, keys, values are the same tensor; `pos` is added to queries & keys).
    """
    # TODO(synk): distinct cross-attention keys/values and `attention_weights` are not implemented.
    del keys, values, attention_weights
    mask_add = None
    if attention_mask is not None:
        # bool [B, S], True == padded key  ->  additive -1e9 on the f32 logits.
        mask_add = jnp.where(attention_mask[:, None, :], -1e9, 0.0).astype(jnp.float32)
    att = fused_self_attention_block(params["att"], queries, pos, mask_add,
                                     h=h, d_k=d_k, d_v=d_v)
    return fused_ffn_block(params["ffn"], att)


# ----------------------------- deterministic parameter init -----------------------------

def init_encoder_layer_params(key, d_model, d_k, d_v, h, d_ff):
    ks = jax.random.split(key, 12)

    def dense(k, fi, fo):
        return jax.random.normal(k, (fi, fo), jnp.float32) * 0.02

    def bias(k, n):
        return jax.random.normal(k, (1, n), jnp.float32) * 0.01

    wq = dense(ks[0], d_model, h * d_k)
    wk = dense(ks[1], d_model, h * d_k)
    return {
        "att": {
            # W_q and W_k concatenated (shared pos-added input); MXU operands stored in bf16.
            "wqk": jnp.concatenate([wq, wk], axis=1).astype(jnp.bfloat16),
            "bqk": jnp.concatenate([bias(ks[2], h * d_k), bias(ks[3], h * d_k)], axis=1),
            "wv": dense(ks[4], d_model, h * d_v).astype(jnp.bfloat16),
            "bv": bias(ks[5], h * d_v),
            "wo": dense(ks[6], h * d_v, d_model).astype(jnp.bfloat16),
            "bo": bias(ks[7], d_model),
            "ln_g": jnp.ones((1, d_model), jnp.float32),
            "ln_b": jnp.zeros((1, d_model), jnp.float32),
        },
        "ffn": {
            "w1": dense(ks[8], d_model, d_ff).astype(jnp.bfloat16),
            "b1": bias(ks[9], d_ff),
            "w2": dense(ks[10], d_ff, d_model).astype(jnp.bfloat16),
            "b2": bias(ks[11], d_model),
            "ln_g": jnp.ones((1, d_model), jnp.float32),
            "ln_b": jnp.zeros((1, d_model), jnp.float32),
        },
    }


# ----------------------------- pure-JAX reference (same mixed precision) -----------------------------

def reference_forward(params, x, mask_bool, pos, *, h, d_k, d_v, eps=1e-5):
    bf16, f32 = jnp.bfloat16, jnp.float32
    pa, pf = params["att"], params["ffn"]

    def mm(a, w):
        return jnp.dot(a.astype(bf16), w, preferred_element_type=f32)

    def ln(z, g, b):
        mu = jnp.mean(z, -1, keepdims=True)
        var = jnp.mean((z - mu) ** 2, -1, keepdims=True)
        return (z - mu) * jax.lax.rsqrt(var + eps) * g + b

    B, T, D = x.shape
    qk_in = x + pos if pos is not None else x
    qk = mm(qk_in, pa["wqk"]) + pa["bqk"]
    v = mm(x, pa["wv"]) + pa["bv"]
    H = h * d_k
    q = qk[..., :H].reshape(B, T, h, d_k).transpose(0, 2, 1, 3)
    k = qk[..., H:].reshape(B, T, h, d_k).transpose(0, 2, 1, 3)
    vh = v.reshape(B, T, h, d_v).transpose(0, 2, 1, 3)
    s = jnp.einsum("bhqd,bhkd->bhqk", q.astype(bf16), k.astype(bf16),
                   preferred_element_type=f32) / math.sqrt(d_k)
    if mask_bool is not None:
        s = s + jnp.where(mask_bool[:, None, None, :], -1e9, 0.0)
    p = jax.nn.softmax(s, axis=-1)
    o = jnp.einsum("bhqk,bhkd->bhqd", p.astype(bf16), vh.astype(bf16),
                   preferred_element_type=f32)
    o = o.transpose(0, 2, 1, 3).reshape(B, T, h * d_v)
    x1 = ln(qk_in + (mm(o, pa["wo"]) + pa["bo"]), pa["ln_g"], pa["ln_b"])
    hdn = jnp.maximum(mm(x1, pf["w1"]) + pf["b1"], 0.0)
    return ln(x1 + (mm(hdn, pf["w2"]) + pf["b2"]), pf["ln_g"], pf["ln_b"])


# ----------------------------- main -----------------------------

if __name__ == "__main__":
    # Small shapes consistent with the module (d_model, h*d_k, d_ff scaled down).
    B, S = 2, 16
    d_model, d_k, d_v, h, d_ff = 32, 8, 8, 4, 64

    key = jax.random.PRNGKey(0)
    kx, kpos, kp = jax.random.split(key, 3)

    x = jax.random.normal(kx, (B, S, d_model), jnp.float32)
    pos = jax.random.normal(kpos, (B, S, d_model), jnp.float32) * 0.1
    # Boolean key-padding mask (True == padded); batch 1 has its last 4 tokens padded.
    attention_mask = jnp.arange(S)[None, :] >= jnp.array([S, S - 4])[:, None]

    params = init_encoder_layer_params(kp, d_model, d_k, d_v, h, d_ff)

    out = encoder_layer_forward(params, x, x, x, attention_mask=attention_mask,
                                pos=pos, h=h, d_k=d_k, d_v=d_v)
    out = jax.block_until_ready(out)

    assert out.shape == (B, S, d_model), out.shape
    assert bool(jnp.all(jnp.isfinite(out)))

    ref = reference_forward(params, x, attention_mask, pos, h=h, d_k=d_k, d_v=d_v)
    assert bool(jnp.allclose(out, ref, atol=5e-2, rtol=5e-2)), \
        float(jnp.max(jnp.abs(out - ref)))

    print("KERNEL_OK")
</pallas_src>

<mosaic_0001>
module attributes {stable_mosaic.version = 11 : i64} {
  func.func @_mha_kernel(%arg0: i32, %arg1: memref<1x16x32xf32, #tpu.memory_space<vmem>>, %arg2: memref<1x16x32xf32, #tpu.memory_space<vmem>>, %arg3: memref<1x1x16xf32, #tpu.memory_space<vmem>>, %arg4: memref<32x64xbf16, #tpu.memory_space<vmem>>, %arg5: memref<1x64xf32, #tpu.memory_space<vmem>>, %arg6: memref<32x32xbf16, #tpu.memory_space<vmem>>, %arg7: memref<1x32xf32, #tpu.memory_space<vmem>>, %arg8: memref<32x32xbf16, #tpu.memory_space<vmem>>, %arg9: memref<1x32xf32, #tpu.memory_space<vmem>>, %arg10: memref<1x32xf32, #tpu.memory_space<vmem>>, %arg11: memref<1x32xf32, #tpu.memory_space<vmem>>, %arg12: memref<1x16x32xf32, #tpu.memory_space<vmem>>) attributes {dimension_semantics = [#tpu.dimension_semantics<parallel>], iteration_bounds = array<i64: 2>, scalar_prefetch = 0 : i64, scratch_operands = 0 : i64, tpu.core_type = #tpu.core_type<tc>, window_params = [{transform_indices = @transform_0, window_bounds = array<i64: 1, 16, 32>}, {transform_indices = @transform_1, window_bounds = array<i64: 1, 16, 32>}, {transform_indices = @transform_2, window_bounds = array<i64: 1, 1, 16>}, {pipeline_mode = #tpu.pipeline_mode<synchronous>, transform_indices = @transform_3, window_bounds = array<i64: 32, 64>}, {pipeline_mode = #tpu.pipeline_mode<synchronous>, transform_indices = @transform_4, window_bounds = array<i64: 1, 64>}, {pipeline_mode = #tpu.pipeline_mode<synchronous>, transform_indices = @transform_5, window_bounds = array<i64: 32, 32>}, {pipeline_mode = #tpu.pipeline_mode<synchronous>, transform_indices = @transform_6, window_bounds = array<i64: 1, 32>}, {pipeline_mode = #tpu.pipeline_mode<synchronous>, transform_indices = @transform_7, window_bounds = array<i64: 32, 32>}, {pipeline_mode = #tpu.pipeline_mode<synchronous>, transform_indices = @transform_8, window_bounds = array<i64: 1, 32>}, {pipeline_mode = #tpu.pipeline_mode<synchronous>, transform_indices = @transform_9, window_bounds = array<i64: 1, 32>}, {pipeline_mode = #tpu.pipeline_mode<synchronous>, transform_indices = @transform_10, window_bounds = array<i64: 1, 32>}, {transform_indices = @transform_11, window_bounds = array<i64: 1, 16, 32>}]} {
    %c0 = arith.constant 0 : index
    %c0_0 = arith.constant 0 : index
    %c0_1 = arith.constant 0 : index
    %0 = vector.load %arg1[%c0, %c0_0, %c0_1] : memref<1x16x32xf32, #tpu.memory_space<vmem>>, vector<1x16x32xf32>
    %1 = vector.shape_cast %0 : vector<1x16x32xf32> to vector<16x32xf32>
    %c0_2 = arith.constant 0 : index
    %c0_3 = arith.constant 0 : index
    %c0_4 = arith.constant 0 : index
    %2 = vector.load %arg2[%c0_2, %c0_3, %c0_4] : memref<1x16x32xf32, #tpu.memory_space<vmem>>, vector<1x16x32xf32>
    %3 = vector.shape_cast %2 : vector<1x16x32xf32> to vector<16x32xf32>
    %4 = arith.addf %1, %3 : vector<16x32xf32>
    %5 = arith.truncf %4 : vector<16x32xf32> to vector<16x32xbf16>
    %c0_5 = arith.constant 0 : index
    %c0_6 = arith.constant 0 : index
    %6 = vector.load %arg4[%c0_5, %c0_6] : memref<32x64xbf16, #tpu.memory_space<vmem>>, vector<32x64xbf16>
    %cst = arith.constant dense<0.000000e+00> : vector<16x64xf32>
    %7 = tpu.matmul %5, %6, %cst {dimension_numbers = #tpu.dot_dimension_numbers<[1], [0], [0], [1], [0, 0, 1, 1], [], []>} : vector<16x32xbf16>, vector<32x64xbf16>, vector<16x64xf32> -> vector<16x64xf32>
    %c0_7 = arith.constant 0 : index
    %c0_8 = arith.constant 0 : index
    %8 = vector.load %arg5[%c0_7, %c0_8] : memref<1x64xf32, #tpu.memory_space<vmem>>, vector<1x64xf32>
    %9 = vector.broadcast %8 : vector<1x64xf32> to vector<16x64xf32>
    %10 = arith.addf %7, %9 : vector<16x64xf32>
    %11 = arith.truncf %1 : vector<16x32xf32> to vector<16x32xbf16>
    %c0_9 = arith.constant 0 : index
    %c0_10 = arith.constant 0 : index
    %12 = vector.load %arg6[%c0_9, %c0_10] : memref<32x32xbf16, #tpu.memory_space<vmem>>, vector<32x32xbf16>
    %cst_11 = arith.constant dense<0.000000e+00> : vector<16x32xf32>
    %13 = tpu.matmul %11, %12, %cst_11 {dimension_numbers = #tpu.dot_dimension_numbers<[1], [0], [0], [1], [0, 0, 1, 1], [], []>} : vector<16x32xbf16>, vector<32x32xbf16>, vector<16x32xf32> -> vector<16x32xf32>
    %c0_12 = arith.constant 0 : index
    %c0_13 = arith.constant 0 : index
    %14 = vector.load %arg7[%c0_12, %c0_13] : memref<1x32xf32, #tpu.memory_space<vmem>>, vector<1x32xf32>
    %15 = vector.broadcast %14 : vector<1x32xf32> to vector<16x32xf32>
    %16 = arith.addf %13, %15 : vector<16x32xf32>
    %c0_14 = arith.constant 0 : index
    %c0_15 = arith.constant 0 : index
    %c0_16 = arith.constant 0 : index
    %17 = vector.load %arg3[%c0_14, %c0_15, %c0_16] : memref<1x1x16xf32, #tpu.memory_space<vmem>>, vector<1x1x16xf32>
    %18 = vector.shape_cast %17 : vector<1x1x16xf32> to vector<1x16xf32>
    %19 = vector.extract_strided_slice %10 {offsets = [0, 0], sizes = [16, 8], strides = [1, 1]} : vector<16x64xf32> to vector<16x8xf32>
    %20 = vector.extract_strided_slice %10 {offsets = [0, 32], sizes = [16, 8], strides = [1, 1]} : vector<16x64xf32> to vector<16x8xf32>
    %21 = vector.extract_strided_slice %16 {offsets = [0, 0], sizes = [16, 8], strides = [1, 1]} : vector<16x32xf32> to vector<16x8xf32>
    %22 = arith.truncf %19 : vector<16x8xf32> to vector<16x8xbf16>
    %23 = arith.truncf %20 : vector<16x8xf32> to vector<16x8xbf16>
    "tpu.trace_start"() <{level = 10 : i32, message = "qd,kd->qk"}> : () -> ()
    %cst_17 = arith.constant dense<0.000000e+00> : vector<16x16xf32>
    %24 = tpu.matmul %22, %23, %cst_17 {dimension_numbers = #tpu.dot_dimension_numbers<[1], [1], [0], [0], [0, 0, 1, 0], [], []>} : vector<16x8xbf16>, vector<16x8xbf16>, vector<16x16xf32> -> vector<16x16xf32>
    "tpu.trace_stop"() : () -> ()
    %cst_18 = arith.constant 0.353553385 : f32
    %25 = vector.broadcast %cst_18 : f32 to vector<16x16xf32>
    %26 = arith.mulf %24, %25 : vector<16x16xf32>
    %27 = vector.broadcast %18 : vector<1x16xf32> to vector<16x16xf32>
    %28 = arith.addf %26, %27 : vector<16x16xf32>
    %cst_19 = arith.constant dense<0xFF800000> : vector<16xf32>
    %29 = vector.multi_reduction <maximumf>, %28, %cst_19 [1] : vector<16x16xf32> to vector<16xf32>
    %30 = vector.shape_cast %29 : vector<16xf32> to vector<16x1xf32>
    %31 = vector.broadcast %30 : vector<16x1xf32> to vector<16x16xf32>
    %32 = arith.subf %28, %31 : vector<16x16xf32>
    %33 = math.exp %32 : vector<16x16xf32>
    %cst_20 = arith.constant dense<0.000000e+00> : vector<16xf32>
    %34 = vector.multi_reduction <add>, %33, %cst_20 [1] : vector<16x16xf32> to vector<16xf32>
    %35 = vector.shape_cast %34 : vector<16xf32> to vector<16x1xf32>
    %36 = tpu.reciprocal %35 {approx = true} : vector<16x1xf32> -> vector<16x1xf32>
    %37 = vector.broadcast %36 : vector<16x1xf32> to vector<16x16xf32>
    %38 = arith.mulf %33, %37 : vector<16x16xf32>
    %39 = arith.truncf %38 : vector<16x16xf32> to vector<16x16xbf16>
    %40 = arith.truncf %21 : vector<16x8xf32> to vector<16x8xbf16>
    "tpu.trace_start"() <{level = 10 : i32, message = "qk,kd->qd"}> : () -> ()
    %cst_21 = arith.constant dense<0.000000e+00> : vector<16x8xf32>
    %41 = tpu.matmul %39, %40, %cst_21 {dimension_numbers = #tpu.dot_dimension_numbers<[1], [0], [0], [1], [0, 0, 1, 1], [], []>} : vector<16x16xbf16>, vector<16x8xbf16>, vector<16x8xf32> -> vector<16x8xf32>
    "tpu.trace_stop"() : () -> ()
    %42 = vector.extract_strided_slice %10 {offsets = [0, 8], sizes = [16, 8], strides = [1, 1]} : vector<16x64xf32> to vector<16x8xf32>
    %43 = vector.extract_strided_slice %10 {offsets = [0, 40], sizes = [16, 8], strides = [1, 1]} : vector<16x64xf32> to vector<16x8xf32>
    %44 = vector.extract_strided_slice %16 {offsets = [0, 8], sizes = [16, 8], strides = [1, 1]} : vector<16x32xf32> to vector<16x8xf32>
    %45 = arith.truncf %42 : vector<16x8xf32> to vector<16x8xbf16>
    %46 = arith.truncf %43 : vector<16x8xf32> to vector<16x8xbf16>
    "tpu.trace_start"() <{level = 10 : i32, message = "qd,kd->qk"}> : () -> ()
    %cst_22 = arith.constant dense<0.000000e+00> : vector<16x16xf32>
    %47 = tpu.matmul %45, %46, %cst_22 {dimension_numbers = #tpu.dot_dimension_numbers<[1], [1], [0], [0], [0, 0, 1, 0], [], []>} : vector<16x8xbf16>, vector<16x8xbf16>, vector<16x16xf32> -> vector<16x16xf32>
    "tpu.trace_stop"() : () -> ()
    %cst_23 = arith.constant 0.353553385 : f32
    %48 = vector.broadcast %cst_23 : f32 to vector<16x16xf32>
    %49 = arith.mulf %47, %48 : vector<16x16xf32>
    %50 = vector.broadcast %18 : vector<1x16xf32> to vector<16x16xf32>
    %51 = arith.addf %49, %50 : vector<16x16xf32>
    %cst_24 = arith.constant dense<0xFF800000> : vector<16xf32>
    %52 = vector.multi_reduction <maximumf>, %51, %cst_24 [1] : vector<16x16xf32> to vector<16xf32>
    %53 = vector.shape_cast %52 : vector<16xf32> to vector<16x1xf32>
    %54 = vector.broadcast %53 : vector<16x1xf32> to vector<16x16xf32>
    %55 = arith.subf %51, %54 : vector<16x16xf32>
    %56 = math.exp %55 : vector<16x16xf32>
    %cst_25 = arith.constant dense<0.000000e+00> : vector<16xf32>
    %57 = vector.multi_reduction <add>, %56, %cst_25 [1] : vector<16x16xf32> to vector<16xf32>
    %58 = vector.shape_cast %57 : vector<16xf32> to vector<16x1xf32>
    %59 = tpu.reciprocal %58 {approx = true} : vector<16x1xf32> -> vector<16x1xf32>
    %60 = vector.broadcast %59 : vector<16x1xf32> to vector<16x16xf32>
    %61 = arith.mulf %56, %60 : vector<16x16xf32>
    %62 = arith.truncf %61 : vector<16x16xf32> to vector<16x16xbf16>
    %63 = arith.truncf %44 : vector<16x8xf32> to vector<16x8xbf16>
    "tpu.trace_start"() <{level = 10 : i32, message = "qk,kd->qd"}> : () -> ()
    %cst_26 = arith.constant dense<0.000000e+00> : vector<16x8xf32>
    %64 = tpu.matmul %62, %63, %cst_26 {dimension_numbers = #tpu.dot_dimension_numbers<[1], [0], [0], [1], [0, 0, 1, 1], [], []>} : vector<16x16xbf16>, vector<16x8xbf16>, vector<16x8xf32> -> vector<16x8xf32>
    "tpu.trace_stop"() : () -> ()
    %65 = vector.extract_strided_slice %10 {offsets = [0, 16], sizes = [16, 8], strides = [1, 1]} : vector<16x64xf32> to vector<16x8xf32>
    %66 = vector.extract_strided_slice %10 {offsets = [0, 48], sizes = [16, 8], strides = [1, 1]} : vector<16x64xf32> to vector<16x8xf32>
    %67 = vector.extract_strided_slice %16 {offsets = [0, 16], sizes = [16, 8], strides = [1, 1]} : vector<16x32xf32> to vector<16x8xf32>
    %68 = arith.truncf %65 : vector<16x8xf32> to vector<16x8xbf16>
    %69 = arith.truncf %66 : vector<16x8xf32> to vector<16x8xbf16>
    "tpu.trace_start"() <{level = 10 : i32, message = "qd,kd->qk"}> : () -> ()
    %cst_27 = arith.constant dense<0.000000e+00> : vector<16x16xf32>
    %70 = tpu.matmul %68, %69, %cst_27 {dimension_numbers = #tpu.dot_dimension_numbers<[1], [1], [0], [0], [0, 0, 1, 0], [], []>} : vector<16x8xbf16>, vector<16x8xbf16>, vector<16x16xf32> -> vector<16x16xf32>
    "tpu.trace_stop"() : () -> ()
    %cst_28 = arith.constant 0.353553385 : f32
    %71 = vector.broadcast %cst_28 : f32 to vector<16x16xf32>
    %72 = arith.mulf %70, %71 : vector<16x16xf32>
    %73 = vector.broadcast %18 : vector<1x16xf32> to vector<16x16xf32>
    %74 = arith.addf %72, %73 : vector<16x16xf32>
    %cst_29 = arith.constant dense<0xFF800000> : vector<16xf32>
    %75 = vector.multi_reduction <maximumf>, %74, %cst_29 [1] : vector<16x16xf32> to vector<16xf32>
    %76 = vector.shape_cast %75 : vector<16xf32> to vector<16x1xf32>
    %77 = vector.broadcast %76 : vector<16x1xf32> to vector<16x16xf32>
    %78 = arith.subf %74, %77 : vector<16x16xf32>
    %79 = math.exp %78 : vector<16x16xf32>
    %cst_30 = arith.constant dense<0.000000e+00> : vector<16xf32>
    %80 = vector.multi_reduction <add>, %79, %cst_30 [1] : vector<16x16xf32> to vector<16xf32>
    %81 = vector.shape_cast %80 : vector<16xf32> to vector<16x1xf32>
    %82 = tpu.reciprocal %81 {approx = true} : vector<16x1xf32> -> vector<16x1xf32>
    %83 = vector.broadcast %82 : vector<16x1xf32> to vector<16x16xf32>
    %84 = arith.mulf %79, %83 : vector<16x16xf32>
    %85 = arith.truncf %84 : vector<16x16xf32> to vector<16x16xbf16>
    %86 = arith.truncf %67 : vector<16x8xf32> to vector<16x8xbf16>
    "tpu.trace_start"() <{level = 10 : i32, message = "qk,kd->qd"}> : () -> ()
    %cst_31 = arith.constant dense<0.000000e+00> : vector<16x8xf32>
    %87 = tpu.matmul %85, %86, %cst_31 {dimension_numbers = #tpu.dot_dimension_numbers<[1], [0], [0], [1], [0, 0, 1, 1], [], []>} : vector<16x16xbf16>, vector<16x8xbf16>, vector<16x8xf32> -> vector<16x8xf32>
    "tpu.trace_stop"() : () -> ()
    %88 = vector.extract_strided_slice %10 {offsets = [0, 24], sizes = [16, 8], strides = [1, 1]} : vector<16x64xf32> to vector<16x8xf32>
    %89 = vector.extract_strided_slice %10 {offsets = [0, 56], sizes = [16, 8], strides = [1, 1]} : vector<16x64xf32> to vector<16x8xf32>
    %90 = vector.extract_strided_slice %16 {offsets = [0, 24], sizes = [16, 8], strides = [1, 1]} : vector<16x32xf32> to vector<16x8xf32>
    %91 = arith.truncf %88 : vector<16x8xf32> to vector<16x8xbf16>
    %92 = arith.truncf %89 : vector<16x8xf32> to vector<16x8xbf16>
    "tpu.trace_start"() <{level = 10 : i32, message = "qd,kd->qk"}> : () -> ()
    %cst_32 = arith.constant dense<0.000000e+00> : vector<16x16xf32>
    %93 = tpu.matmul %91, %92, %cst_32 {dimension_numbers = #tpu.dot_dimension_numbers<[1], [1], [0], [0], [0, 0, 1, 0], [], []>} : vector<16x8xbf16>, vector<16x8xbf16>, vector<16x16xf32> -> vector<16x16xf32>
    "tpu.trace_stop"() : () -> ()
    %cst_33 = arith.constant 0.353553385 : f32
    %94 = vector.broadcast %cst_33 : f32 to vector<16x16xf32>
    %95 = arith.mulf %93, %94 : vector<16x16xf32>
    %96 = vector.broadcast %18 : vector<1x16xf32> to vector<16x16xf32>
    %97 = arith.addf %95, %96 : vector<16x16xf32>
    %cst_34 = arith.constant dense<0xFF800000> : vector<16xf32>
    %98 = vector.multi_reduction <maximumf>, %97, %cst_34 [1] : vector<16x16xf32> to vector<16xf32>
    %99 = vector.shape_cast %98 : vector<16xf32> to vector<16x1xf32>
    %100 = vector.broadcast %99 : vector<16x1xf32> to vector<16x16xf32>
    %101 = arith.subf %97, %100 : vector<16x16xf32>
    %102 = math.exp %101 : vector<16x16xf32>
    %cst_35 = arith.constant dense<0.000000e+00> : vector<16xf32>
    %103 = vector.multi_reduction <add>, %102, %cst_35 [1] : vector<16x16xf32> to vector<16xf32>
    %104 = vector.shape_cast %103 : vector<16xf32> to vector<16x1xf32>
    %105 = tpu.reciprocal %104 {approx = true} : vector<16x1xf32> -> vector<16x1xf32>
    %106 = vector.broadcast %105 : vector<16x1xf32> to vector<16x16xf32>
    %107 = arith.mulf %102, %106 : vector<16x16xf32>
    %108 = arith.truncf %107 : vector<16x16xf32> to vector<16x16xbf16>
    %109 = arith.truncf %90 : vector<16x8xf32> to vector<16x8xbf16>
    "tpu.trace_start"() <{level = 10 : i32, message = "qk,kd->qd"}> : () -> ()
    %cst_36 = arith.constant dense<0.000000e+00> : vector<16x8xf32>
    %110 = tpu.matmul %108, %109, %cst_36 {dimension_numbers = #tpu.dot_dimension_numbers<[1], [0], [0], [1], [0, 0, 1, 1], [], []>} : vector<16x16xbf16>, vector<16x8xbf16>, vector<16x8xf32> -> vector<16x8xf32>
    "tpu.trace_stop"() : () -> ()
    %111 = tpu.concatenate %41, %64, %87, %110 in 1 : vector<16x8xf32>, vector<16x8xf32>, vector<16x8xf32>, vector<16x8xf32> -> vector<16x32xf32>
    %112 = arith.truncf %111 : vector<16x32xf32> to vector<16x32xbf16>
    %c0_37 = arith.constant 0 : index
    %c0_38 = arith.constant 0 : index
    %113 = vector.load %arg8[%c0_37, %c0_38] : memref<32x32xbf16, #tpu.memory_space<vmem>>, vector<32x32xbf16>
    %cst_39 = arith.constant dense<0.000000e+00> : vector<16x32xf32>
    %114 = tpu.matmul %112, %113, %cst_39 {dimension_numbers = #tpu.dot_dimension_numbers<[1], [0], [0], [1], [0, 0, 1, 1], [], []>} : vector<16x32xbf16>, vector<32x32xbf16>, vector<16x32xf32> -> vector<16x32xf32>
    %c0_40 = arith.constant 0 : index
    %c0_41 = arith.constant 0 : index
    %115 = vector.load %arg9[%c0_40, %c0_41] : memref<1x32xf32, #tpu.memory_space<vmem>>, vector<1x32xf32>
    %116 = vector.broadcast %115 : vector<1x32xf32> to vector<16x32xf32>
    %117 = arith.addf %114, %116 : vector<16x32xf32>
    %118 = arith.addf %4, %117 : vector<16x32xf32>
    %c0_42 = arith.constant 0 : index
    %c0_43 = arith.constant 0 : index
    %119 = vector.load %arg10[%c0_42, %c0_43] : memref<1x32xf32, #tpu.memory_space<vmem>>, vector<1x32xf32>
    %c0_44 = arith.constant 0 : index
    %c0_45 = arith.constant 0 : index
    %120 = vector.load %arg11[%c0_44, %c0_45] : memref<1x32xf32, #tpu.memory_space<vmem>>, vector<1x32xf32>
    %cst_46 = arith.constant dense<0.000000e+00> : vector<16xf32>
    %121 = vector.multi_reduction <add>, %118, %cst_46 [1] : vector<16x32xf32> to vector<16xf32>
    %122 = vector.shape_cast %121 : vector<16xf32> to vector<16x1xf32>
    %cst_47 = arith.constant 3.200000e+01 : f32
    %123 = vector.broadcast %cst_47 : f32 to vector<16x1xf32>
    %124 = arith.divf %122, %123 : vector<16x1xf32>
    %125 = arith.mulf %118, %118 : vector<16x32xf32>
    %cst_48 = arith.constant dense<0.000000e+00> : vector<16xf32>
    %126 = vector.multi_reduction <add>, %125, %cst_48 [1] : vector<16x32xf32> to vector<16xf32>
    %127 = vector.shape_cast %126 : vector<16xf32> to vector<16x1xf32>
    %cst_49 = arith.constant 3.200000e+01 : f32
    %128 = vector.broadcast %cst_49 : f32 to vector<16x1xf32>
    %129 = arith.divf %127, %128 : vector<16x1xf32>
    %130 = arith.mulf %124, %124 : vector<16x1xf32>
    %131 = arith.subf %129, %130 : vector<16x1xf32>
    %132 = vector.broadcast %124 : vector<16x1xf32> to vector<16x32xf32>
    %133 = arith.subf %118, %132 : vector<16x32xf32>
    %cst_50 = arith.constant 9.99999974E-6 : f32
    %134 = vector.broadcast %cst_50 : f32 to vector<16x1xf32>
    %135 = arith.addf %131, %134 : vector<16x1xf32>
    %136 = math.rsqrt %135 : vector<16x1xf32>
    %137 = vector.broadcast %136 : vector<16x1xf32> to vector<16x32xf32>
    %138 = arith.mulf %133, %137 : vector<16x32xf32>
    %139 = vector.broadcast %119 : vector<1x32xf32> to vector<16x32xf32>
    %140 = arith.mulf %138, %139 : vector<16x32xf32>
    %141 = vector.broadcast %120 : vector<1x32xf32> to vector<16x32xf32>
    %142 = arith.addf %140, %141 : vector<16x32xf32>
    %c0_51 = arith.constant 0 : index
    %c0_52 = arith.constant 0 : index
    %c0_53 = arith.constant 0 : index
    %143 = vector.load %arg12[%c0_51, %c0_52, %c0_53] : memref<1x16x32xf32, #tpu.memory_space<vmem>>, vector<1x16x32xf32>
    %144 = vector.shape_cast %143 : vector<1x16x32xf32> to vector<16x32xf32>
    %145 = vector.shape_cast %142 : vector<16x32xf32> to vector<1x16x32xf32>
    tpu.vector_store %arg12[%c0_51, %c0_52, %c0_53], %145 {strides = array<i32>} : memref<1x16x32xf32, #tpu.memory_space<vmem>>, vector<1x16x32xf32>,
    return
  }
  func.func @transform_0(%arg0: i32) -> (i32, i32, i32) {
    %c0_i32 = arith.constant 0 : i32
    %c0_i32_0 = arith.constant 0 : i32
    %c0_i32_1 = arith.constant 0 : i32
    return %arg0, %c0_i32, %c0_i32_0 : i32, i32, i32
  }
  func.func @transform_1(%arg0: i32) -> (i32, i32, i32) {
    %c0_i32 = arith.constant 0 : i32
    %c0_i32_0 = arith.constant 0 : i32
    %c0_i32_1 = arith.constant 0 : i32
    return %arg0, %c0_i32, %c0_i32_0 : i32, i32, i32
  }
  func.func @transform_2(%arg0: i32) -> (i32, i32, i32) {
    %c0_i32 = arith.constant 0 : i32
    %c0_i32_0 = arith.constant 0 : i32
    %c0_i32_1 = arith.constant 0 : i32
    return %arg0, %c0_i32, %c0_i32_0 : i32, i32, i32
  }
  func.func @transform_3(%arg0: i32) -> (i32, i32) {
    %c0_i32 = arith.constant 0 : i32
    %c0_i32_0 = arith.constant 0 : i32
    %c0_i32_1 = arith.constant 0 : i32
    return %c0_i32, %c0_i32_0 : i32, i32
  }
  func.func @transform_4(%arg0: i32) -> (i32, i32) {
    %c0_i32 = arith.constant 0 : i32
    %c0_i32_0 = arith.constant 0 : i32
    %c0_i32_1 = arith.constant 0 : i32
    return %c0_i32, %c0_i32_0 : i32, i32
  }
  func.func @transform_5(%arg0: i32) -> (i32, i32) {
    %c0_i32 = arith.constant 0 : i32
    %c0_i32_0 = arith.constant 0 : i32
    %c0_i32_1 = arith.constant 0 : i32
    return %c0_i32, %c0_i32_0 : i32, i32
  }
  func.func @transform_6(%arg0: i32) -> (i32, i32) {
    %c0_i32 = arith.constant 0 : i32
    %c0_i32_0 = arith.constant 0 : i32
    %c0_i32_1 = arith.constant 0 : i32
    return %c0_i32, %c0_i32_0 : i32, i32
  }
  func.func @transform_7(%arg0: i32) -> (i32, i32) {
    %c0_i32 = arith.constant 0 : i32
    %c0_i32_0 = arith.constant 0 : i32
    %c0_i32_1 = arith.constant 0 : i32
    return %c0_i32, %c0_i32_0 : i32, i32
  }
  func.func @transform_8(%arg0: i32) -> (i32, i32) {
    %c0_i32 = arith.constant 0 : i32
    %c0_i32_0 = arith.constant 0 : i32
    %c0_i32_1 = arith.constant 0 : i32
    return %c0_i32, %c0_i32_0 : i32, i32
  }
  func.func @transform_9(%arg0: i32) -> (i32, i32) {
    %c0_i32 = arith.constant 0 : i32
    %c0_i32_0 = arith.constant 0 : i32
    %c0_i32_1 = arith.constant 0 : i32
    return %c0_i32, %c0_i32_0 : i32, i32
  }
  func.func @transform_10(%arg0: i32) -> (i32, i32) {
    %c0_i32 = arith.constant 0 : i32
    %c0_i32_0 = arith.constant 0 : i32
    %c0_i32_1 = arith.constant 0 : i32
    return %c0_i32, %c0_i32_0 : i32, i32
  }
  func.func @transform_11(%arg0: i32) -> (i32, i32, i32) {
    %c0_i32 = arith.constant 0 : i32
    %c0_i32_0 = arith.constant 0 : i32
    %c0_i32_1 = arith.constant 0 : i32
    return %arg0, %c0_i32, %c0_i32_0 : i32, i32, i32
  }
}

</mosaic_0001>

<llo_original>
// kernel: tpu_custom_call.1
$region0: #{tpu_custom_call.1}
  #allocation0 [shape = 'u32[]', space=smem, size = 0x4, offset = 0x4, fixed_abs, tag = 'smem constant byte address 0x4 - core index']
  #allocation1 [shape = 'u32[72,128]{1,0:T(1,128)}', space=vmem, size = 0x9000, scoped, tag = 'internal scratch']
  %s0 = inlined_call_operand.hbm [shape: f32[2,16,32], index: 0, kind: input, shape index: {}]
  %s1 = inlined_call_operand.hbm [shape: f32[2,16,32], index: 1, kind: input, shape index: {}]
  %s2 = inlined_call_operand.hbm [shape: f32[2,1,16], index: 2, kind: input, shape index: {}]
  %s3 = inlined_call_operand.hbm [shape: bf16[32,64], index: 3, kind: input, shape index: {}]
  %s4 = inlined_call_operand.vmem [shape: f32[1,64], index: 4, kind: input, shape index: {}]
  %s5 = inlined_call_operand.hbm [shape: bf16[32,32], index: 5, kind: input, shape index: {}]
  %s6 = inlined_call_operand.vmem [shape: f32[1,32], index: 6, kind: input, shape index: {}]
  %s7 = inlined_call_operand.hbm [shape: bf16[32,32], index: 7, kind: input, shape index: {}]
  %s8 = inlined_call_operand.vmem [shape: f32[1,32], index: 8, kind: input, shape index: {}]
  %s9 = inlined_call_operand.vmem [shape: f32[1,32], index: 9, kind: input, shape index: {}]
  %s10 = inlined_call_operand.vmem [shape: f32[1,32], index: 10, kind: input, shape index: {}]
  %s11 = inlined_call_operand.hbm [shape: f32[2,16,32], index: 11, kind: output, shape index: {}]
  %s12 = sld [smem:[#allocation0]]
  $region101: #{tpu_custom_call.1} parent=0
    _
  %s14 = ssub.s32 1, %s12
  %s15 = scalar_select 0, %s14, %s12
  $region1: #{tpu_custom_call.1} parent=0
    #allocation2 [shape = 'u8[16384]{0}', space=vmem, size = 0x4000, scoped, tag = 'input window, operand 0']
    #allocation3 [shape = 's32[2]{0}', space=sflag, size = 0x8, scoped, tag = 'scoped memory for tpu_custom_call.1']
    #allocation4 [shape = 's32[2]{0}', space=sflag, size = 0x8, scoped, tag = 'scoped memory for tpu_custom_call.1']
    #allocation5 [shape = 'u8[16384]{0}', space=vmem, size = 0x4000, scoped, tag = 'input window, operand 1']
    #allocation6 [shape = 's32[2]{0}', space=sflag, size = 0x8, scoped, tag = 'scoped memory for tpu_custom_call.1']
    #allocation7 [shape = 'u8[1024]{0}', space=vmem, size = 0x400, scoped, tag = 'input window, operand 2']
    #allocation8 [shape = 'u8[8192]{0}', space=vmem, size = 0x2000, scoped, tag = 'input window, operand 3, single buffered']
    #allocation9 [shape = 's32[1]{0}', space=sflag, size = 0x4, scoped, tag = 'scoped memory for tpu_custom_call.1']
    #allocation10 [shape = 'u8[8192]{0}', space=vmem, size = 0x2000, scoped, tag = 'input window, operand 5, single buffered']
    #allocation11 [shape = 'u8[8192]{0}', space=vmem, size = 0x2000, scoped, tag = 'input window, operand 7, single buffered']
    #allocation12 [shape = 's32[1]{0}', space=sflag, size = 0x4, scoped, tag = 'scoped memory for tpu_custom_call.1']
    #allocation13 [shape = 'u8[16384]{0}', space=vmem, size = 0x4000, scoped, tag = 'output window, operand 0']
    %16 = vsyncpa [#allocation3], 0
    %s17 = scalar_lea.sflag [#allocation3], 1
    %18 = vsyncpa %s17, 0
    %19 = vsyncpa [#allocation6], 0
    %s20 = scalar_lea.sflag [#allocation6], 1
    %21 = vsyncpa %s20, 0
    %22 = vsyncpa [#allocation9], 0
    %23 = vsyncpa [#allocation12], 0
    %24 = vsyncpa [#allocation4], 0
    %s25 = scalar_lea.sflag [#allocation4], 1
    %26 = vsyncpa %s25, 0
    loop: start=0, step=1, limit=4
    $region2: #{tpu_custom_call.1} parent=1 // loop_pre_header
      _
    $region3: #{tpu_custom_call.1} parent=1 // loop_header
      %s28 = sphi 0, %s32
      %p29 = scmp.ge.s32.totalorder %s28, 4
      %s38 = sphi 0, %s40
      %s41 = sphi 0, %s38
      %s42 = sphi 0, %s41
      %s58 = sphi 0, %s42
      %s64 = sphi 0, %s66
      %s67 = sphi 0, %s64
      %s68 = sphi 0, %s67
      %s84 = sphi 0, %s68
      %s90 = sphi 0, %s92
      %s93 = sphi 0, %s90
      %s94 = sphi 0, %s93
      %s110 = sphi 0, %s94
      %s114 = sphi 0, %s114
      %s116 = sphi 0, %s114
      %s117 = sphi 0, %s116
      %s131 = sphi 0, %s117
      %s135 = sphi 0, %s135
      %s137 = sphi 0, %s135
      %s138 = sphi 0, %s137
      %s152 = sphi 0, %s138
      %s156 = sphi 0, %s156
      %s158 = sphi 0, %s156
      %s159 = sphi 0, %s158
      %s173 = sphi 0, %s159
      %s177 = sphi 0, %s177
      %s179 = sphi 0, %s177
      %s180 = sphi 0, %s179
      %s194 = sphi 0, %s180
      %s198 = sphi 0, %s198
      %s200 = sphi 0, %s198
      %s201 = sphi 0, %s200
      %s215 = sphi 0, %s201
      %s219 = sphi 0, %s219
      %s221 = sphi 0, %s219
      %s222 = sphi 0, %s221
      %s236 = sphi 0, %s222
      %s240 = sphi 0, %s240
      %s242 = sphi 0, %s240
      %s243 = sphi 0, %s242
      %s257 = sphi 0, %s243
      %s261 = sphi 0, %s261
      %s263 = sphi 0, %s261
      %s264 = sphi 0, %s263
      %s278 = sphi 0, %s264
      %s284 = sphi 0, %s286
      %s287 = sphi 0, %s284
      %s288 = sphi 0, %s287
      %s304 = sphi 0, %s288
    $region4: #{tpu_custom_call.1} parent=1 // loop_header_branch
      %31 = sbr.rel (%p29) target = $region8
    $region5: #{tpu_custom_call.1} parent=1 // loop_body
      %s33 = ssub.s32 %s28, 1
      %s34 = ssub.s32 %s28, 2
      %s35 = sadd.s32 %s28, 1
      %s36 = ssub.s32 %s28, %s35
      %p37 = scmp.eq.s32.totalorder %s36, 0
      %s39 = sadd.s32 %s38, 1
      %s40 = scalar_select %p37, %s38, %s39
      %p43 = pneg %p37
      %p44 = scmp.eq.s32.totalorder %s28, 1
      %p45 = por %p43, %p44
      %p46 = scmp.ne.s32.totalorder %s38, %s41
      %p47 = scmp.eq.s32.totalorder %s28, 0
      %p48 = por %p46, %p47
      %p49 = scmp.ne.s32.totalorder %s38, %s41
      %p50 = scmp.eq.s32.totalorder %s33, 1
      %p51 = por %p49, %p50
      %p52 = scmp.ne.s32.totalorder %s41, %s42
      %p53 = scmp.eq.s32.totalorder %s33, 0
      %p54 = por %p52, %p53
      %p55 = scmp.ne.s32.totalorder %s41, %s42
      %p56 = scmp.eq.s32.totalorder %s34, 1
      %p57 = por %p55, %p56
      %p59 = scmp.ne.s32.totalorder %s42, %s58
      %p60 = scmp.eq.s32.totalorder %s34, 0
      %p61 = por %p59, %p60
      %s62 = ssub.s32 %s28, %s35
      %p63 = scmp.eq.s32.totalorder %s62, 0
      %s65 = sadd.s32 %s64, 1
      %s66 = scalar_select %p63, %s64, %s65
      %p69 = pneg %p63
      %p70 = scmp.eq.s32.totalorder %s28, 1
      %p71 = por %p69, %p70
      %p72 = scmp.ne.s32.totalorder %s64, %s67
      %p73 = scmp.eq.s32.totalorder %s28, 0
      %p74 = por %p72, %p73
      %p75 = scmp.ne.s32.totalorder %s64, %s67
      %p76 = scmp.eq.s32.totalorder %s33, 1
      %p77 = por %p75, %p76
      %p78 = scmp.ne.s32.totalorder %s67, %s68
      %p79 = scmp.eq.s32.totalorder %s33, 0
      %p80 = por %p78, %p79
      %p81 = scmp.ne.s32.totalorder %s67, %s68
      %p82 = scmp.eq.s32.totalorder %s34, 1
      %p83 = por %p81, %p82
      %p85 = scmp.ne.s32.totalorder %s68, %s84
      %p86 = scmp.eq.s32.totalorder %s34, 0
      %p87 = por %p85, %p86
      %s88 = ssub.s32 %s28, %s35
      %p89 = scmp.eq.s32.totalorder %s88, 0
      %s91 = sadd.s32 %s90, 1
      %s92 = scalar_select %p89, %s90, %s91
      %p95 = pneg %p89
      %p96 = scmp.eq.s32.totalorder %s28, 1
      %p97 = por %p95, %p96
      %p98 = scmp.ne.s32.totalorder %s90, %s93
      %p99 = scmp.eq.s32.totalorder %s28, 0
      %p100 = por %p98, %p99
      %p101 = scmp.ne.s32.totalorder %s90, %s93
      %p102 = scmp.eq.s32.totalorder %s33, 1
      %p103 = por %p101, %p102
      %p104 = scmp.ne.s32.totalorder %s93, %s94
      %p105 = scmp.eq.s32.totalorder %s33, 0
      %p106 = por %p104, %p105
      %p107 = scmp.ne.s32.totalorder %s93, %s94
      %p108 = scmp.eq.s32.totalorder %s34, 1
      %p109 = por %p107, %p108
      %p111 = scmp.ne.s32.totalorder %s94, %s110
      %p112 = scmp.eq.s32.totalorder %s34, 0
      %p113 = por %p111, %p112
      %s115 = sadd.s32 %s114, 1
      %p118 = scmp.eq.s32.totalorder %s28, 1
      %p119 = scmp.ne.s32.totalorder %s114, %s116
      %p120 = scmp.eq.s32.totalorder %s28, 0
      %p121 = por %p119, %p120
      %p122 = scmp.ne.s32.totalorder %s114, %s116
      %p123 = scmp.eq.s32.totalorder %s33, 1
      %p124 = por %p122, %p123
      %p125 = scmp.ne.s32.totalorder %s116, %s117
      %p126 = scmp.eq.s32.totalorder %s33, 0
      %p127 = por %p125, %p126
      %p128 = scmp.ne.s32.totalorder %s116, %s117
      %p129 = scmp.eq.s32.totalorder %s34, 1
      %p130 = por %p128, %p129
      %p132 = scmp.ne.s32.totalorder %s117, %s131
      %p133 = scmp.eq.s32.totalorder %s34, 0
      %p134 = por %p132, %p133
      %s136 = sadd.s32 %s135, 1
      %p139 = scmp.eq.s32.totalorder %s28, 1
      %p140 = scmp.ne.s32.totalorder %s135, %s137
      %p141 = scmp.eq.s32.totalorder %s28, 0
      %p142 = por %p140, %p141
      %p143 = scmp.ne.s32.totalorder %s135, %s137
      %p144 = scmp.eq.s32.totalorder %s33, 1
      %p145 = por %p143, %p144
      %p146 = scmp.ne.s32.totalorder %s137, %s138
      %p147 = scmp.eq.s32.totalorder %s33, 0
      %p148 = por %p146, %p147
      %p149 = scmp.ne.s32.totalorder %s137, %s138
      %p150 = scmp.eq.s32.totalorder %s34, 1
      %p151 = por %p149, %p150
      %p153 = scmp.ne.s32.totalorder %s138, %s152
      %p154 = scmp.eq.s32.totalorder %s34, 0
      %p155 = por %p153, %p154
      %s157 = sadd.s32 %s156, 1
      %p160 = scmp.eq.s32.totalorder %s28, 1
      %p161 = scmp.ne.s32.totalorder %s156, %s158
      %p162 = scmp.eq.s32.totalorder %s28, 0
      %p163 = por %p161, %p162
      %p164 = scmp.ne.s32.totalorder %s156, %s158
      %p165 = scmp.eq.s32.totalorder %s33, 1
      %p166 = por %p164, %p165
      %p167 = scmp.ne.s32.totalorder %s158, %s159
      %p168 = scmp.eq.s32.totalorder %s33, 0
      %p169 = por %p167, %p168
      %p170 = scmp.ne.s32.totalorder %s158, %s159
      %p171 = scmp.eq.s32.totalorder %s34, 1
      %p172 = por %p170, %p171
      %p174 = scmp.ne.s32.totalorder %s159, %s173
      %p175 = scmp.eq.s32.totalorder %s34, 0
      %p176 = por %p174, %p175
      %s178 = sadd.s32 %s177, 1
      %p181 = scmp.eq.s32.totalorder %s28, 1
      %p182 = scmp.ne.s32.totalorder %s177, %s179
      %p183 = scmp.eq.s32.totalorder %s28, 0
      %p184 = por %p182, %p183
      %p185 = scmp.ne.s32.totalorder %s177, %s179
      %p186 = scmp.eq.s32.totalorder %s33, 1
      %p187 = por %p185, %p186
      %p188 = scmp.ne.s32.totalorder %s179, %s180
      %p189 = scmp.eq.s32.totalorder %s33, 0
      %p190 = por %p188, %p189
      %p191 = scmp.ne.s32.totalorder %s179, %s180
      %p192 = scmp.eq.s32.totalorder %s34, 1
      %p193 = por %p191, %p192
      %p195 = scmp.ne.s32.totalorder %s180, %s194
      %p196 = scmp.eq.s32.totalorder %s34, 0
      %p197 = por %p195, %p196
      %s199 = sadd.s32 %s198, 1
      %p202 = scmp.eq.s32.totalorder %s28, 1
      %p203 = scmp.ne.s32.totalorder %s198, %s200
      %p204 = scmp.eq.s32.totalorder %s28, 0
      %p205 = por %p203, %p204
      %p206 = scmp.ne.s32.totalorder %s198, %s200
      %p207 = scmp.eq.s32.totalorder %s33, 1
      %p208 = por %p206, %p207
      %p209 = scmp.ne.s32.totalorder %s200, %s201
      %p210 = scmp.eq.s32.totalorder %s33, 0
      %p211 = por %p209, %p210
      %p212 = scmp.ne.s32.totalorder %s200, %s201
      %p213 = scmp.eq.s32.totalorder %s34, 1
      %p214 = por %p212, %p213
      %p216 = scmp.ne.s32.totalorder %s201, %s215
      %p217 = scmp.eq.s32.totalorder %s34, 0
      %p218 = por %p216, %p217
      %s220 = sadd.s32 %s219, 1
      %p223 = scmp.eq.s32.totalorder %s28, 1
      %p224 = scmp.ne.s32.totalorder %s219, %s221
      %p225 = scmp.eq.s32.totalorder %s28, 0
      %p226 = por %p224, %p225
      %p227 = scmp.ne.s32.totalorder %s219, %s221
      %p228 = scmp.eq.s32.totalorder %s33, 1
      %p229 = por %p227, %p228
      %p230 = scmp.ne.s32.totalorder %s221, %s222
      %p231 = scmp.eq.s32.totalorder %s33, 0
      %p232 = por %p230, %p231
      %p233 = scmp.ne.s32.totalorder %s221, %s222
      %p234 = scmp.eq.s32.totalorder %s34, 1
      %p235 = por %p233, %p234
      %p237 = scmp.ne.s32.totalorder %s222, %s236
      %p238 = scmp.eq.s32.totalorder %s34, 0
      %p239 = por %p237, %p238
      %s241 = sadd.s32 %s240, 1
      %p244 = scmp.eq.s32.totalorder %s28, 1
      %p245 = scmp.ne.s32.totalorder %s240, %s242
      %p246 = scmp.eq.s32.totalorder %s28, 0
      %p247 = por %p245, %p246
      %p248 = scmp.ne.s32.totalorder %s240, %s242
      %p249 = scmp.eq.s32.totalorder %s33, 1
      %p250 = por %p248, %p249
      %p251 = scmp.ne.s32.totalorder %s242, %s243
      %p252 = scmp.eq.s32.totalorder %s33, 0
      %p253 = por %p251, %p252
      %p254 = scmp.ne.s32.totalorder %s242, %s243
      %p255 = scmp.eq.s32.totalorder %s34, 1
      %p256 = por %p254, %p255
      %p258 = scmp.ne.s32.totalorder %s243, %s257
      %p259 = scmp.eq.s32.totalorder %s34, 0
      %p260 = por %p258, %p259
      %s262 = sadd.s32 %s261, 1
      %p265 = scmp.eq.s32.totalorder %s28, 1
      %p266 = scmp.ne.s32.totalorder %s261, %s263
      %p267 = scmp.eq.s32.totalorder %s28, 0
      %p268 = por %p266, %p267
      %p269 = scmp.ne.s32.totalorder %s261, %s263
      %p270 = scmp.eq.s32.totalorder %s33, 1
      %p271 = por %p269, %p270
      %p272 = scmp.ne.s32.totalorder %s263, %s264
      %p273 = scmp.eq.s32.totalorder %s33, 0
      %p274 = por %p272, %p273
      %p275 = scmp.ne.s32.totalorder %s263, %s264
      %p276 = scmp.eq.s32.totalorder %s34, 1
      %p277 = por %p275, %p276
      %p279 = scmp.ne.s32.totalorder %s264, %s278
      %p280 = scmp.eq.s32.totalorder %s34, 0
      %p281 = por %p279, %p280
      %s282 = ssub.s32 %s28, %s35
      %p283 = scmp.eq.s32.totalorder %s282, 0
      %s285 = sadd.s32 %s284, 1
      %s286 = scalar_select %p283, %s284, %s285
      %p289 = pneg %p283
      %p290 = scmp.eq.s32.totalorder %s28, 1
      %p291 = por %p289, %p290
      %p292 = scmp.ne.s32.totalorder %s284, %s287
      %p293 = scmp.eq.s32.totalorder %s28, 0
      %p294 = por %p292, %p293
      %p295 = scmp.ne.s32.totalorder %s284, %s287
      %p296 = scmp.eq.s32.totalorder %s33, 1
      %p297 = por %p295, %p296
      %p298 = scmp.ne.s32.totalorder %s287, %s288
      %p299 = scmp.eq.s32.totalorder %s33, 0
      %p300 = por %p298, %p299
      %p301 = scmp.ne.s32.totalorder %s287, %s288
      %p302 = scmp.eq.s32.totalorder %s34, 1
      %p303 = por %p301, %p302
      %p305 = scmp.ne.s32.totalorder %s288, %s304
      %p306 = scmp.eq.s32.totalorder %s34, 0
      %p307 = por %p305, %p306
      %p308 = scmp.le.s32.totalorder 1, %s28
      %p309 = scmp.lt.s32.totalorder %s28, 3
      %p310 = pnand %p308, %p309
      %p311 = pneg %p310
      // Predicated region
      $region9: #{tpu_custom_call.1} parent=5 // pred_check
        _
      $region10: #{tpu_custom_call.1} parent=5 // pred_check_branch
        %313 = sbr.rel (%p310) target = $region12
      $region11: #{tpu_custom_call.1} parent=5 // pred_region
        %s314 = ssub.s32 %s28, 1
        // Predicated region
        $region13: #{tpu_custom_call.1} parent=11 // pred_check
          %p315 = pneg %p127
        $region14: #{tpu_custom_call.1} parent=11 // pred_check_branch
          %317 = sbr.rel (%p315) target = $region16
        $region15: #{tpu_custom_call.1} parent=11 // pred_region
          %319 = vsyncadd [#allocation9], 0
          %s320 = sshll.u32 %s3, 4
          %s321 = int_to_ptr.hbm [resolvable:$true] %s320
          %s322 = sshll.u32 [#allocation8], 4
          %s323 = int_to_ptr.vmem [resolvable:$true] %s322
          %328 = dma.hbm_to_vmem [thread:$0]  %s321, 256, %s323, [#allocation9], 64, 64, 4
        $region16: #{tpu_custom_call.1} parent=11 // pred_fallthru
          _
        // Predicated region
        $region17: #{tpu_custom_call.1} parent=11 // pred_check
          %p329 = pneg %p148
        $region18: #{tpu_custom_call.1} parent=11 // pred_check_branch
          %331 = sbr.rel (%p329) target = $region20
        $region19: #{tpu_custom_call.1} parent=11 // pred_region
          _
        $region20: #{tpu_custom_call.1} parent=11 // pred_fallthru
          _
        // Predicated region
        $region21: #{tpu_custom_call.1} parent=11 // pred_check
          %p332 = pneg %p169
        $region22: #{tpu_custom_call.1} parent=11 // pred_check_branch
          %334 = sbr.rel (%p332) target = $region24
        $region23: #{tpu_custom_call.1} parent=11 // pred_region
          %336 = vsyncadd [#allocation9], 0
          %s337 = sshll.u32 %s5, 4
          %s338 = int_to_ptr.hbm [resolvable:$true] %s337
          %s339 = sshll.u32 [#allocation10], 4
          %s340 = int_to_ptr.vmem [resolvable:$true] %s339
          %345 = dma.hbm_to_vmem [thread:$0]  %s338, 256, %s340, [#allocation9], 64, 64, 4
        $region24: #{tpu_custom_call.1} parent=11 // pred_fallthru
          _
        // Predicated region
        $region25: #{tpu_custom_call.1} parent=11 // pred_check
          %p346 = pneg %p190
        $region26: #{tpu_custom_call.1} parent=11 // pred_check_branch
          %348 = sbr.rel (%p346) target = $region28
        $region27: #{tpu_custom_call.1} parent=11 // pred_region
          _
        $region28: #{tpu_custom_call.1} parent=11 // pred_fallthru
          _
        // Predicated region
        $region29: #{tpu_custom_call.1} parent=11 // pred_check
          %p349 = pneg %p211
        $region30: #{tpu_custom_call.1} parent=11 // pred_check_branch
          %351 = sbr.rel (%p349) target = $region32
        $region31: #{tpu_custom_call.1} parent=11 // pred_region
          %353 = vsyncadd [#allocation12], 0
          %s354 = sshll.u32 %s7, 4
          %s355 = int_to_ptr.hbm [resolvable:$true] %s354
          %s356 = sshll.u32 [#allocation11], 4
          %s357 = int_to_ptr.vmem [resolvable:$true] %s356
          %362 = dma.hbm_to_vmem [thread:$0]  %s355, 256, %s357, [#allocation12], 64, 64, 4
        $region32: #{tpu_custom_call.1} parent=11 // pred_fallthru
          _
        // Predicated region
        $region33: #{tpu_custom_call.1} parent=11 // pred_check
          %p363 = pneg %p232
        $region34: #{tpu_custom_call.1} parent=11 // pred_check_branch
          %365 = sbr.rel (%p363) target = $region36
        $region35: #{tpu_custom_call.1} parent=11 // pred_region
          _
        $region36: #{tpu_custom_call.1} parent=11 // pred_fallthru
          _
        // Predicated region
        $region37: #{tpu_custom_call.1} parent=11 // pred_check
          %p366 = pneg %p253
        $region38: #{tpu_custom_call.1} parent=11 // pred_check_branch
          %368 = sbr.rel (%p366) target = $region40
        $region39: #{tpu_custom_call.1} parent=11 // pred_region
          _
        $region40: #{tpu_custom_call.1} parent=11 // pred_fallthru
          _
        // Predicated region
        $region41: #{tpu_custom_call.1} parent=11 // pred_check
          %p369 = pneg %p274
        $region42: #{tpu_custom_call.1} parent=11 // pred_check_branch
          %371 = sbr.rel (%p369) target = $region44
        $region43: #{tpu_custom_call.1} parent=11 // pred_region
          _
        $region44: #{tpu_custom_call.1} parent=11 // pred_fallthru
          _
      $region12: #{tpu_custom_call.1} parent=5 // pred_fallthru
        _
      %p372 = scmp.lt.s32.totalorder %s28, 2
      // Predicated region
      $region45: #{tpu_custom_call.1} parent=5 // pred_check
        %p373 = pneg %p372
      $region46: #{tpu_custom_call.1} parent=5 // pred_check_branch
        %375 = sbr.rel (%p373) target = $region48
      $region47: #{tpu_custom_call.1} parent=5 // pred_region
        // Predicated region
        $region49: #{tpu_custom_call.1} parent=47 // pred_check
          %p376 = pneg %p48
        $region50: #{tpu_custom_call.1} parent=47 // pred_check_branch
          %378 = sbr.rel (%p376) target = $region52
        $region51: #{tpu_custom_call.1} parent=47 // pred_region
          %s379 = sand.u32 %s38, 1
          %s380 = scalar_lea.sflag [#allocation3], %s379
          %s381 = sand.u32 %s38, 1
          %s382 = smul.addr %s381, 16
          %s383 = scalar_lea.vmem [#allocation2], %s382
          %385 = vsyncadd %s380, 0
          %s386 = smul.addr %s28, 2
          %s387 = smul.addr %s386, 8
          %s388 = scalar_lea.hbm %s0, %s387
          %s389 = sshll.u32 %s388, 4
          %s390 = int_to_ptr.hbm [resolvable:$true] %s389
          %s391 = sshll.u32 %s383, 4
          %s392 = int_to_ptr.vmem [resolvable:$true] %s391
          %397 = dma.hbm_to_vmem [thread:$0]  %s390, 256, %s392, %s380, 128, 128, 8
        $region52: #{tpu_custom_call.1} parent=47 // pred_fallthru
          _
        // Predicated region
        $region53: #{tpu_custom_call.1} parent=47 // pred_check
          %p398 = pneg %p74
        $region54: #{tpu_custom_call.1} parent=47 // pred_check_branch
          %400 = sbr.rel (%p398) target = $region56
        $region55: #{tpu_custom_call.1} parent=47 // pred_region
          %s401 = sand.u32 %s28, 1
          %s402 = scalar_lea.sflag [#allocation6], %s401
          %s403 = sand.u32 %s64, 1
          %s404 = smul.addr %s403, 16
          %s405 = scalar_lea.vmem [#allocation5], %s404
          %407 = vsyncadd %s402, 0
          %s408 = smul.addr %s28, 2
          %s409 = smul.addr %s408, 8
          %s410 = scalar_lea.hbm %s1, %s409
          %s411 = sshll.u32 %s410, 4
          %s412 = int_to_ptr.hbm [resolvable:$true] %s411
          %s413 = sshll.u32 %s405, 4
          %s414 = int_to_ptr.vmem [resolvable:$true] %s413
          %419 = dma.hbm_to_vmem [thread:$0]  %s412, 256, %s414, %s402, 128, 128, 8
        $region56: #{tpu_custom_call.1} parent=47 // pred_fallthru
          _
        // Predicated region
        $region57: #{tpu_custom_call.1} parent=47 // pred_check
          %p420 = pneg %p100
        $region58: #{tpu_custom_call.1} parent=47 // pred_check_branch
          %422 = sbr.rel (%p420) target = $region60
        $region59: #{tpu_custom_call.1} parent=47 // pred_region
          %s423 = sand.u32 %s28, 1
          %s424 = scalar_lea.sflag [#allocation6], %s423
          %s425 = sand.u32 %s90, 1
          %s426 = scalar_lea.vmem [#allocation7], %s425
          %428 = vsyncadd %s424, 0
          %s429 = scalar_lea.hbm %s2, %s28
          %s431 = sshll.u32 %s429, 4
          %s432 = int_to_ptr.hbm [resolvable:$true] %s431
          %s433 = sshll.u32 %s426, 4
          %s434 = int_to_ptr.vmem [resolvable:$true] %s433
          %436 = dma.hbm_to_vmem [thread:$0]  %s432, 16, %s434, %s424
        $region60: #{tpu_custom_call.1} parent=47 // pred_fallthru
          _
      $region48: #{tpu_custom_call.1} parent=5 // pred_fallthru
        _
      %p437 = scmp.le.s32.totalorder 1, %s28
      %p438 = scmp.lt.s32.totalorder %s28, 3
      %p439 = pnand %p437, %p438
      %p440 = pneg %p439
      // Predicated region
      $region61: #{tpu_custom_call.1} parent=5 // pred_check
        _
      $region62: #{tpu_custom_call.1} parent=5 // pred_check_branch
        %442 = sbr.rel (%p439) target = $region64
      $region63: #{tpu_custom_call.1} parent=5 // pred_region
        %s443 = ssub.s32 %s28, 1
        %s444 = sand.u32 %s41, 1
        %s445 = scalar_lea.sflag [#allocation3], %s444
        %s446 = sand.u32 %s41, 1
        %s447 = smul.addr %s446, 16
        %s448 = scalar_lea.vmem [#allocation2], %s447
        // Predicated region
        $region65: #{tpu_custom_call.1} parent=63 // pred_check
          %p449 = pneg %p54
        $region66: #{tpu_custom_call.1} parent=63 // pred_check_branch
          %451 = sbr.rel (%p449) target = $region68
        $region67: #{tpu_custom_call.1} parent=63 // pred_region
          %453 = dma.done %s445, 256
        $region68: #{tpu_custom_call.1} parent=63 // pred_fallthru
          _
        %s454 = sand.u32 %s33, 1
        %s455 = scalar_lea.sflag [#allocation6], %s454
        %s456 = sand.u32 %s67, 1
        %s457 = smul.addr %s456, 16
        %s458 = scalar_lea.vmem [#allocation5], %s457
        // Predicated region
        $region69: #{tpu_custom_call.1} parent=63 // pred_check
          %p459 = pneg %p80
        $region70: #{tpu_custom_call.1} parent=63 // pred_check_branch
          %461 = sbr.rel (%p459) target = $region72
        $region71: #{tpu_custom_call.1} parent=63 // pred_region
          %463 = dma.done %s455, 256
        $region72: #{tpu_custom_call.1} parent=63 // pred_fallthru
          _
        %s464 = sand.u32 %s33, 1
        %s465 = scalar_lea.sflag [#allocation6], %s464
        %s466 = sand.u32 %s93, 1
        %s467 = scalar_lea.vmem [#allocation7], %s466
        // Predicated region
        $region73: #{tpu_custom_call.1} parent=63 // pred_check
          %p468 = pneg %p106
        $region74: #{tpu_custom_call.1} parent=63 // pred_check_branch
          %470 = sbr.rel (%p468) target = $region76
        $region75: #{tpu_custom_call.1} parent=63 // pred_region
          %472 = dma.done %s465, 16
        $region76: #{tpu_custom_call.1} parent=63 // pred_fallthru
          _
        // Predicated region
        $region77: #{tpu_custom_call.1} parent=63 // pred_check
          %p473 = pneg %p127
        $region78: #{tpu_custom_call.1} parent=63 // pred_check_branch
          %475 = sbr.rel (%p473) target = $region80
        $region79: #{tpu_custom_call.1} parent=63 // pred_region
          %477 = dma.done [#allocation9], 256
        $region80: #{tpu_custom_call.1} parent=63 // pred_fallthru
          _
        // Predicated region
        $region81: #{tpu_custom_call.1} parent=63 // pred_check
          %p478 = pneg %p169
        $region82: #{tpu_custom_call.1} parent=63 // pred_check_branch
          %480 = sbr.rel (%p478) target = $region84
        $region83: #{tpu_custom_call.1} parent=63 // pred_region
          %482 = dma.done [#allocation9], 256
        $region84: #{tpu_custom_call.1} parent=63 // pred_fallthru
          _
        // Predicated region
        $region85: #{tpu_custom_call.1} parent=63 // pred_check
          %p483 = pneg %p211
        $region86: #{tpu_custom_call.1} parent=63 // pred_check_branch
          %485 = sbr.rel (%p483) target = $region88
        $region87: #{tpu_custom_call.1} parent=63 // pred_region
          %487 = dma.done [#allocation12], 256
        $region88: #{tpu_custom_call.1} parent=63 // pred_fallthru
          _
        %s488 = sand.u32 %s41, 1
        %s489 = scalar_lea.sflag [#allocation3], %s488
        %s490 = sand.u32 %s41, 1
        %s491 = smul.addr %s490, 16
        %s492 = scalar_lea.vmem [#allocation2], %s491
        %p493 = pneg %p54
        %p494 = pneg %p51
        %s495 = sand.u32 %s33, 1
        %s496 = scalar_lea.sflag [#allocation6], %s495
        %s497 = sand.u32 %s67, 1
        %s498 = smul.addr %s497, 16
        %s499 = scalar_lea.vmem [#allocation5], %s498
        %p500 = pneg %p80
        %p501 = pneg %p77
        %s502 = sand.u32 %s33, 1
        %s503 = scalar_lea.sflag [#allocation6], %s502
        %s504 = sand.u32 %s93, 1
        %s505 = scalar_lea.vmem [#allocation7], %s504
        %p506 = pneg %p106
        %p507 = pneg %p103
        %p508 = pneg %p127
        %p509 = pneg %p124
        %p510 = pneg %p148
        %p511 = pneg %p145
        %p512 = pneg %p169
        %p513 = pneg %p166
        %p514 = pneg %p190
        %p515 = pneg %p187
        %p516 = pneg %p211
        %p517 = pneg %p208
        %p518 = pneg %p232
        %p519 = pneg %p229
        %p520 = pneg %p253
        %p521 = pneg %p250
        %p522 = pneg %p274
        %p523 = pneg %p271
        %p524 = pneg %p300
        %p525 = pneg %p297
        %s526 = sand.u32 %s287, 1
        %s527 = scalar_lea.sflag [#allocation4], %s526
        %s528 = sand.u32 %s287, 1
        %s529 = smul.addr %s528, 16
        %s530 = scalar_lea.vmem [#allocation13], %s529
        %v532 = vld [vmem:[%s448] sm:$0xff]
        %v533 = vld [vmem:[%s448 + $0x8] sm:$0xff]
        %v534 = vld [vmem:[%s458] sm:$0xff]
        %v535 = vld [vmem:[%s458 + $0x8] sm:$0xff]
        %v536 = vadd.f32 %v532, %v534
        %v537 = vadd.f32 %v533, %v535
        %v538 = vpack.c.bf16 %v537, %v536
        %v539 = vld [vmem:[#allocation8] sm:$0xf]
        %v540 = vld [vmem:[#allocation8 + $0x4] sm:$0xf]
        %v541 = vld [vmem:[#allocation8 + $0x8] sm:$0xf]
        %v542 = vld [vmem:[#allocation8 + $0xc] sm:$0xf]
        %v543 = vld [vmem:[%s4] sm:$0x1]
        %v545 = vperm.slane %v543, 0
        %v551 = vunpack.c.l.b16 %v539
        %v552 = vunpack.c.l.b16 %v540
        %v553 = vunpack.c.l.b16 %v541
        %v554 = vunpack.c.l.b16 %v542
        %v555 = vpack.c.b16 %v552, %v551
        %v556 = vpack.c.b16 %v554, %v553
        %vm559 = vcmask 261120
        %v561 = vsel %vm559, %v538, 0
        %563 = vmatpush.bf16.msra.mxu0 0
        %564 = vmatpush.bf16.msra.mxu0 0
        %565 = vmatpush.bf16.msra.mxu0 0
        %566 = vmatpush.bf16.msra.mxu0 0
        %567 = vmatpush.bf16.msra.mxu0 0
        %568 = vmatpush.bf16.msra.mxu0 0
        %569 = vmatpush.bf16.msra.mxu0 %v556
        %570 = vmatpush.bf16.msra.mxu0 %v555
        %571 = vmatmul.bf16.gmra.mxu0 %v561
        %v572 = vpop.f32.mrf.mxu0
        %v573 = vadd.f32 %v545, %v572
        %v574 = vpop.f32.mrf.mxu0
        %v575 = vadd.f32 %v545, %v574
        %576 = vdwg.mxu0
        %v577 = vpack.c.bf16 %v533, %v532
        %v578 = vld [vmem:[#allocation10] sm:$0xf]
        %v579 = vld [vmem:[#allocation10 + $0x4] sm:$0xf]
        %v580 = vld [vmem:[#allocation10 + $0x8] sm:$0xf]
        %v581 = vld [vmem:[#allocation10 + $0xc] sm:$0xf]
        %v582 = vld [vmem:[%s6] sm:$0x1]
        %v584 = vperm.slane %v582, 0
        %v590 = vunpack.c.l.b16 %v578
        %v591 = vunpack.c.l.b16 %v579
        %v592 = vunpack.c.l.b16 %v580
        %v593 = vunpack.c.l.b16 %v581
        %v594 = vpack.c.b16 %v591, %v590
        %v595 = vpack.c.b16 %v593, %v592
        %v599 = vsel %vm559, %v577, 0
        %601 = vmatpush.bf16.msra.mxu0 0
        %602 = vmatpush.bf16.msra.mxu0 0
        %603 = vmatpush.bf16.msra.mxu0 0
        %604 = vmatpush.bf16.msra.mxu0 0
        %605 = vmatpush.bf16.msra.mxu0 0
        %606 = vmatpush.bf16.msra.mxu0 0
        %607 = vmatpush.bf16.msra.mxu0 %v595
        %608 = vmatpush.bf16.msra.mxu0 %v594
        %609 = vmatmul.bf16.gmra.mxu0 %v599
        %v610 = vpop.f32.mrf.mxu0
        %v611 = vadd.f32 %v584, %v610
        %v612 = vpop.f32.mrf.mxu0
        %v613 = vadd.f32 %v584, %v612
        %614 = vdwg.mxu0
        %v615 = vld [vmem:[%s467] sm:$0x1]
        %v616 = vpack.c.bf16 %v575, %v573
        %618 = vrot.lane.b32.xlu0 %v616, 96
        %v619 = vpop.permute.xlu0 %618
        %vm620 = vcmask 64512
        %v622 = vsel %vm620, %v616, 0
        %v625 = vsel %vm620, %v619, 0
        %627 = vmatpush.bf16.xpose.msra.mxu0 0
        %628 = vmatpush.bf16.xpose.msra.mxu0 0
        %629 = vmatpush.bf16.xpose.msra.mxu0 0
        %630 = vmatpush.bf16.xpose.msra.mxu0 0
        %631 = vmatpush.bf16.xpose.msra.mxu0 0
        %632 = vmatpush.bf16.xpose.msra.mxu0 0
        %633 = vmatpush.bf16.xpose.msra.mxu0 0
        %634 = vmatpush.bf16.xpose.msra.mxu0 %v625
        %635 = vmatmul.bf16.gmra.mxu0 %v622
        %v636 = vpop.f32.mrf.mxu0
        %v637 = vadd.f32 0.0, %v636
        %v638 = vpop.f32.mrf.mxu0
        %v639 = vadd.f32 0.0, %v638
        %640 = vdwg.mxu0
        %v641 = vmul.f32 %v637, 0.35355338
        %v642 = vmul.f32 %v639, 0.35355338
        %v644 = vperm.slane %v615, 0
        %v646 = vadd.f32 %v641, %v644
        %v647 = vadd.f32 %v642, %v644
        %vm648 = vcmask 130048
        %v649 = vsel %vm648, %v646, -inf
        %650 = vmax.xlane.f32.xlu0 %v649
        %v651 = vpop.xlane.xlu0 %650
        %v652 = vsel %vm648, %v647, -inf
        %653 = vmax.xlane.f32.xlu0 %v652
        %v654 = vpop.xlane.xlu0 %653
        %v655 = vsub.f32 %v646, %v651
        %v656 = vsub.f32 %v647, %v654
        %v657 = vmul.f32 %v655, 1.442695
        %v658 = vpow.pop %v657
        %v659 = vmul.f32 %v656, 1.442695
        %v660 = vpow.pop %v659
        %v661 = vsel %vm648, %v658, 0.0
        %662 = vadd.xlane.f32.xlu0 %v661
        %v663 = vpop.xlane.xlu0 %662
        %v664 = vsel %vm648, %v660, 0.0
        %665 = vadd.xlane.f32.xlu0 %v664
        %v666 = vpop.xlane.xlu0 %665
        %v667 = vrcp.pop %v663
        %v668 = vrcp.pop %v666
        %v669 = vmul.f32 %v658, %v667
        %v670 = vmul.f32 %v660, %v668
        %v671 = vpack.c.bf16 %v670, %v669
        %v672 = vpack.c.bf16 %v613, %v611
        %v674 = vsel %vm648, %v671, 0
        %676 = vmatpush.bf16.msra.mxu0 0
        %677 = vmatpush.bf16.msra.mxu0 0
        %678 = vmatpush.bf16.msra.mxu0 0
        %679 = vmatpush.bf16.msra.mxu0 0
        %680 = vmatpush.bf16.msra.mxu0 0
        %681 = vmatpush.bf16.msra.mxu0 0
        %682 = vmatpush.bf16.msra.mxu0 0
        %683 = vmatpush.bf16.msra.mxu0 %v672
        %684 = vmatmul.bf16.gmra.mxu0 %v674
        %v685 = vpop.f32.mrf.mxu0
        %v686 = vadd.f32 0.0, %v685
        %v687 = vpop.f32.mrf.mxu0
        %v688 = vadd.f32 0.0, %v687
        %689 = vdwg.mxu0
        %690 = vrot.lane.b32.xlu0 %v616, 120
        %v691 = vpop.permute.xlu0 %690
        %692 = vrot.lane.b32.xlu0 %v616, 88
        %v693 = vpop.permute.xlu0 %692
        %v695 = vsel %vm620, %v691, 0
        %v698 = vsel %vm620, %v693, 0
        %700 = vmatpush.bf16.xpose.msra.mxu0 0
        %701 = vmatpush.bf16.xpose.msra.mxu0 0
        %702 = vmatpush.bf16.xpose.msra.mxu0 0
        %703 = vmatpush.bf16.xpose.msra.mxu0 0
        %704 = vmatpush.bf16.xpose.msra.mxu0 0
        %705 = vmatpush.bf16.xpose.msra.mxu0 0
        %706 = vmatpush.bf16.xpose.msra.mxu0 0
        %707 = vmatpush.bf16.xpose.msra.mxu0 %v698
        %708 = vmatmul.bf16.gmra.mxu0 %v695
        %v709 = vpop.f32.mrf.mxu0
        %v710 = vadd.f32 0.0, %v709
        %v711 = vpop.f32.mrf.mxu0
        %v712 = vadd.f32 0.0, %v711
        %713 = vdwg.mxu0
        %v714 = vmul.f32 %v710, 0.35355338
        %v715 = vmul.f32 %v712, 0.35355338
        %v716 = vadd.f32 %v714, %v644
        %v717 = vadd.f32 %v715, %v644
        %v718 = vsel %vm648, %v716, -inf
        %719 = vmax.xlane.f32.xlu0 %v718
        %v720 = vpop.xlane.xlu0 %719
        %v721 = vsel %vm648, %v717, -inf
        %722 = vmax.xlane.f32.xlu0 %v721
        %v723 = vpop.xlane.xlu0 %722
        %v724 = vsub.f32 %v716, %v720
        %v725 = vsub.f32 %v717, %v723
        %v726 = vmul.f32 %v724, 1.442695
        %v727 = vpow.pop %v726
        %v728 = vmul.f32 %v725, 1.442695
        %v729 = vpow.pop %v728
        %v730 = vsel %vm648, %v727, 0.0
        %731 = vadd.xlane.f32.xlu0 %v730
        %v732 = vpop.xlane.xlu0 %731
        %v733 = vsel %vm648, %v729, 0.0
        %734 = vadd.xlane.f32.xlu0 %v733
        %v735 = vpop.xlane.xlu0 %734
        %v736 = vrcp.pop %v732
        %v737 = vrcp.pop %v735
        %v738 = vmul.f32 %v727, %v736
        %v739 = vmul.f32 %v729, %v737
        %v740 = vpack.c.bf16 %v739, %v738
        %742 = vrot.lane.b32.xlu0 %v672, 120
        %v743 = vpop.permute.xlu0 %742
        %v746 = vsel %vm648, %v740, 0
        %748 = vmatpush.bf16.msra.mxu0 0
        %749 = vmatpush.bf16.msra.mxu0 0
        %750 = vmatpush.bf16.msra.mxu0 0
        %751 = vmatpush.bf16.msra.mxu0 0
        %752 = vmatpush.bf16.msra.mxu0 0
        %753 = vmatpush.bf16.msra.mxu0 0
        %754 = vmatpush.bf16.msra.mxu0 0
        %755 = vmatpush.bf16.msra.mxu0 %v743
        %756 = vmatmul.bf16.gmra.mxu0 %v746
        %v757 = vpop.f32.mrf.mxu0
        %v758 = vadd.f32 0.0, %v757
        %v759 = vpop.f32.mrf.mxu0
        %v760 = vadd.f32 0.0, %v759
        %761 = vdwg.mxu0
        %762 = vrot.lane.b32.xlu0 %v616, 112
        %v763 = vpop.permute.xlu0 %762
        %764 = vrot.lane.b32.xlu0 %v616, 80
        %v765 = vpop.permute.xlu0 %764
        %v767 = vsel %vm620, %v763, 0
        %v770 = vsel %vm620, %v765, 0
        %772 = vmatpush.bf16.xpose.msra.mxu0 0
        %773 = vmatpush.bf16.xpose.msra.mxu0 0
        %774 = vmatpush.bf16.xpose.msra.mxu0 0
        %775 = vmatpush.bf16.xpose.msra.mxu0 0
        %776 = vmatpush.bf16.xpose.msra.mxu0 0
        %777 = vmatpush.bf16.xpose.msra.mxu0 0
        %778 = vmatpush.bf16.xpose.msra.mxu0 0
        %779 = vmatpush.bf16.xpose.msra.mxu0 %v770
        %780 = vmatmul.bf16.gmra.mxu0 %v767
        %v781 = vpop.f32.mrf.mxu0
        %v782 = vadd.f32 0.0, %v781
        %v783 = vpop.f32.mrf.mxu0
        %v784 = vadd.f32 0.0, %v783
        %785 = vdwg.mxu0
        %v786 = vmul.f32 %v782, 0.35355338
        %v787 = vmul.f32 %v784, 0.35355338
        %v788 = vadd.f32 %v786, %v644
        %v789 = vadd.f32 %v787, %v644
        %v790 = vsel %vm648, %v788, -inf
        %791 = vmax.xlane.f32.xlu0 %v790
        %v792 = vpop.xlane.xlu0 %791
        %v793 = vsel %vm648, %v789, -inf
        %794 = vmax.xlane.f32.xlu0 %v793
        %v795 = vpop.xlane.xlu0 %794
        %v796 = vsub.f32 %v788, %v792
        %v797 = vsub.f32 %v789, %v795
        %v798 = vmul.f32 %v796, 1.442695
        %v799 = vpow.pop %v798
        %v800 = vmul.f32 %v797, 1.442695
        %v801 = vpow.pop %v800
        %v802 = vsel %vm648, %v799, 0.0
        %803 = vadd.xlane.f32.xlu0 %v802
        %v804 = vpop.xlane.xlu0 %803
        %v805 = vsel %vm648, %v801, 0.0
        %806 = vadd.xlane.f32.xlu0 %v805
        %v807 = vpop.xlane.xlu0 %806
        %v808 = vrcp.pop %v804
        %v809 = vrcp.pop %v807
        %v810 = vmul.f32 %v799, %v808
        %v811 = vmul.f32 %v801, %v809
        %v812 = vpack.c.bf16 %v811, %v810
        %813 = vrot.lane.b32.xlu0 %v672, 112
        %v814 = vpop.permute.xlu0 %813
        %v817 = vsel %vm648, %v812, 0
        %819 = vmatpush.bf16.msra.mxu0 0
        %820 = vmatpush.bf16.msra.mxu0 0
        %821 = vmatpush.bf16.msra.mxu0 0
        %822 = vmatpush.bf16.msra.mxu0 0
        %823 = vmatpush.bf16.msra.mxu0 0
        %824 = vmatpush.bf16.msra.mxu0 0
        %825 = vmatpush.bf16.msra.mxu0 0
        %826 = vmatpush.bf16.msra.mxu0 %v814
        %827 = vmatmul.bf16.gmra.mxu0 %v817
        %v828 = vpop.f32.mrf.mxu0
        %v829 = vadd.f32 0.0, %v828
        %v830 = vpop.f32.mrf.mxu0
        %v831 = vadd.f32 0.0, %v830
        %832 = vdwg.mxu0
        %833 = vrot.lane.b32.xlu0 %v616, 104
        %v834 = vpop.permute.xlu0 %833
        %835 = vrot.lane.b32.xlu0 %v616, 72
        %v836 = vpop.permute.xlu0 %835
        %v838 = vsel %vm620, %v834, 0
        %v841 = vsel %vm620, %v836, 0
        %843 = vmatpush.bf16.xpose.msra.mxu0 0
        %844 = vmatpush.bf16.xpose.msra.mxu0 0
        %845 = vmatpush.bf16.xpose.msra.mxu0 0
        %846 = vmatpush.bf16.xpose.msra.mxu0 0
        %847 = vmatpush.bf16.xpose.msra.mxu0 0
        %848 = vmatpush.bf16.xpose.msra.mxu0 0
        %849 = vmatpush.bf16.xpose.msra.mxu0 0
        %850 = vmatpush.bf16.xpose.msra.mxu0 %v841
        %851 = vmatmul.bf16.gmra.mxu0 %v838
        %v852 = vpop.f32.mrf.mxu0
        %v853 = vadd.f32 0.0, %v852
        %v854 = vpop.f32.mrf.mxu0
        %v855 = vadd.f32 0.0, %v854
        %856 = vdwg.mxu0
        %v857 = vmul.f32 %v853, 0.35355338
        %v858 = vmul.f32 %v855, 0.35355338
        %v859 = vadd.f32 %v857, %v644
        %v860 = vadd.f32 %v858, %v644
        %v861 = vsel %vm648, %v859, -inf
        %862 = vmax.xlane.f32.xlu0 %v861
        %v863 = vpop.xlane.xlu0 %862
        %v864 = vsel %vm648, %v860, -inf
        %865 = vmax.xlane.f32.xlu0 %v864
        %v866 = vpop.xlane.xlu0 %865
        %v867 = vsub.f32 %v859, %v863
        %v868 = vsub.f32 %v860, %v866
        %v869 = vmul.f32 %v867, 1.442695
        %v870 = vpow.pop %v869
        %v871 = vmul.f32 %v868, 1.442695
        %v872 = vpow.pop %v871
        %v873 = vsel %vm648, %v870, 0.0
        %874 = vadd.xlane.f32.xlu0 %v873
        %v875 = vpop.xlane.xlu0 %874
        %v876 = vsel %vm648, %v872, 0.0
        %877 = vadd.xlane.f32.xlu0 %v876
        %v878 = vpop.xlane.xlu0 %877
        %v879 = vrcp.pop %v875
        %v880 = vrcp.pop %v878
        %v881 = vmul.f32 %v870, %v879
        %v882 = vmul.f32 %v872, %v880
        %v883 = vpack.c.bf16 %v882, %v881
        %884 = vrot.lane.b32.xlu0 %v672, 104
        %v885 = vpop.permute.xlu0 %884
        %v888 = vsel %vm648, %v883, 0
        %890 = vmatpush.bf16.msra.mxu0 0
        %891 = vmatpush.bf16.msra.mxu0 0
        %892 = vmatpush.bf16.msra.mxu0 0
        %893 = vmatpush.bf16.msra.mxu0 0
        %894 = vmatpush.bf16.msra.mxu0 0
        %895 = vmatpush.bf16.msra.mxu0 0
        %896 = vmatpush.bf16.msra.mxu0 0
        %897 = vmatpush.bf16.msra.mxu0 %v885
        %898 = vmatmul.bf16.gmra.mxu0 %v888
        %v899 = vpop.f32.mrf.mxu0
        %v900 = vadd.f32 0.0, %v899
        %v901 = vpop.f32.mrf.mxu0
        %v902 = vadd.f32 0.0, %v901
        %903 = vdwg.mxu0
        %906 = vrot.lane.b32.xlu0 %v758, 8
        %v907 = vpop.permute.xlu0 %906
        %908 = vrot.lane.b32.xlu0 %v760, 8
        %v909 = vpop.permute.xlu0 %908
        %914 = vrot.lane.b32.xlu0 %v829, 16
        %v915 = vpop.permute.xlu0 %914
        %916 = vrot.lane.b32.xlu0 %v831, 16
        %v917 = vpop.permute.xlu0 %916
        %922 = vrot.lane.b32.xlu0 %v900, 24
        %v923 = vpop.permute.xlu0 %922
        %924 = vrot.lane.b32.xlu0 %v902, 24
        %v925 = vpop.permute.xlu0 %924
        %v928 = vsel %vm620, %v686, %v907
        %v929 = vsel %vm620, %v688, %v909
        %v930 = vsel %vm648, %v928, %v915
        %v931 = vsel %vm648, %v929, %v917
        %vm932 = vcmask 195584
        %v933 = vsel %vm932, %v930, %v923
        %v934 = vsel %vm932, %v931, %v925
        %v935 = vpack.c.bf16 %v934, %v933
        %v936 = vld [vmem:[#allocation11] sm:$0xf]
        %v937 = vld [vmem:[#allocation11 + $0x4] sm:$0xf]
        %v938 = vld [vmem:[#allocation11 + $0x8] sm:$0xf]
        %v939 = vld [vmem:[#allocation11 + $0xc] sm:$0xf]
        %v940 = vld [vmem:[%s8] sm:$0x1]
        %v942 = vperm.slane %v940, 0
        %v948 = vunpack.c.l.b16 %v936
        %v949 = vunpack.c.l.b16 %v937
        %v950 = vunpack.c.l.b16 %v938
        %v951 = vunpack.c.l.b16 %v939
        %v952 = vpack.c.b16 %v949, %v948
        %v953 = vpack.c.b16 %v951, %v950
        %v957 = vsel %vm559, %v935, 0
        %959 = vmatpush.bf16.msra.mxu0 0
        %960 = vmatpush.bf16.msra.mxu0 0
        %961 = vmatpush.bf16.msra.mxu0 0
        %962 = vmatpush.bf16.msra.mxu0 0
        %963 = vmatpush.bf16.msra.mxu0 0
        %964 = vmatpush.bf16.msra.mxu0 0
        %965 = vmatpush.bf16.msra.mxu0 %v953
        %966 = vmatpush.bf16.msra.mxu0 %v952
        %967 = vmatmul.bf16.gmra.mxu0 %v957
        %v968 = vpop.f32.mrf.mxu0
        %v969 = vadd.f32 %v942, %v968
        %v970 = vpop.f32.mrf.mxu0
        %v971 = vadd.f32 %v942, %v970
        %972 = vdwg.mxu0
        %v973 = vadd.f32 %v536, %v969
        %v974 = vadd.f32 %v537, %v971
        %v975 = vld [vmem:[%s9] sm:$0x1]
        %v976 = vld [vmem:[%s10] sm:$0x1]
        %v977 = vsel %vm559, %v973, 0.0
        %978 = vadd.xlane.f32.xlu0 %v977
        %v979 = vpop.xlane.xlu0 %978
        %v980 = vsel %vm559, %v974, 0.0
        %981 = vadd.xlane.f32.xlu0 %v980
        %v982 = vpop.xlane.xlu0 %981
        %v983 = vrcp.pop 32.0
        %v984 = vmul.f32 32.0, %v983
        %v985 = vsub.f32 1.0, %v984
        %v986 = vmul.f32 %v983, %v985
        %v987 = vadd.f32 %v983, %v986
        %vm988 = vweird.f32 %v983
        %v989 = vsel %vm988, %v983, %v987
        %v990 = vmul.f32 %v979, %v989
        %v991 = vmul.f32 %v982, %v989
        %v992 = vmul.f32 %v973, %v973
        %v993 = vmul.f32 %v974, %v974
        %v994 = vsel %vm559, %v992, 0.0
        %995 = vadd.xlane.f32.xlu0 %v994
        %v996 = vpop.xlane.xlu0 %995
        %v997 = vsel %vm559, %v993, 0.0
        %998 = vadd.xlane.f32.xlu0 %v997
        %v999 = vpop.xlane.xlu0 %998
        %v1000 = vmul.f32 %v996, %v989
        %v1001 = vmul.f32 %v999, %v989
        %v1002 = vmul.f32 %v990, %v990
        %v1003 = vmul.f32 %v991, %v991
        %v1004 = vsub.f32 %v1000, %v1002
        %v1005 = vsub.f32 %v1001, %v1003
        %v1006 = vsub.f32 %v973, %v990
        %v1007 = vsub.f32 %v974, %v991
        %v1008 = vadd.f32 %v1004, 1e-05
        %v1009 = vadd.f32 %v1005, 1e-05
        %v1010 = vrsqrt.pop %v1008
        %v1011 = vmul.f32 %v1010, %v1008
        %v1012 = vmul.f32 %v1011, %v1010
        %v1013 = vmul.f32 0.5, %v1012
        %v1014 = vsub.f32 1.5, %v1013
        %v1015 = vmul.f32 %v1010, %v1014
        %vm1016 = vweird.f32 %v1008
        %vm1017 = vweird.f32 %v1010
        %vm1018 = vmor %vm1016, %vm1017
        %v1019 = vsel %vm1018, %v1010, %v1015
        %v1020 = vrsqrt.pop %v1009
        %v1021 = vmul.f32 %v1020, %v1009
        %v1022 = vmul.f32 %v1021, %v1020
        %v1023 = vmul.f32 0.5, %v1022
        %v1024 = vsub.f32 1.5, %v1023
        %v1025 = vmul.f32 %v1020, %v1024
        %vm1026 = vweird.f32 %v1009
        %vm1027 = vweird.f32 %v1020
        %vm1028 = vmor %vm1026, %vm1027
        %v1029 = vsel %vm1028, %v1020, %v1025
        %v1030 = vmul.f32 %v1006, %v1019
        %v1031 = vmul.f32 %v1007, %v1029
        %v1033 = vperm.slane %v975, 0
        %v1035 = vmul.f32 %v1030, %v1033
        %v1036 = vmul.f32 %v1031, %v1033
        %v1038 = vperm.slane %v976, 0
        %v1040 = vadd.f32 %v1035, %v1038
        %v1041 = vadd.f32 %v1036, %v1038
        %1042 = vst.msk [vmem:[%s530] sm:$0xff] %vm559, %v1040
        %1043 = vst.msk [vmem:[%s530 + $0x8] sm:$0xff] %vm559, %v1041
        %s1044 = sand.u32 %s287, 1
        %s1045 = scalar_lea.sflag [#allocation4], %s1044
        %s1046 = sand.u32 %s287, 1
        %s1047 = smul.addr %s1046, 16
        %s1048 = scalar_lea.vmem [#allocation13], %s1047
        // Predicated region
        $region89: #{tpu_custom_call.1} parent=63 // pred_check
          %p1049 = pneg %p297
        $region90: #{tpu_custom_call.1} parent=63 // pred_check_branch
          %1051 = sbr.rel (%p1049) target = $region92
        $region91: #{tpu_custom_call.1} parent=63 // pred_region
          %1053 = vsyncadd %s1045, 0
          %s1054 = smul.addr %s33, 2
          %s1055 = smul.addr %s1054, 8
          %s1056 = scalar_lea.hbm %s11, %s1055
          %s1057 = sshll.u32 %s1048, 4
          %s1058 = int_to_ptr.vmem [resolvable:$true] %s1057
          %s1059 = sshll.u32 %s1056, 4
          %s1060 = int_to_ptr.hbm [resolvable:$true] %s1059
          %1065 = dma.vmem_to_hbm [thread:$0]  %s1058, 256, %s1060, %s1045, 128, 128, 8
        $region92: #{tpu_custom_call.1} parent=63 // pred_fallthru
          _
      $region64: #{tpu_custom_call.1} parent=5 // pred_fallthru
        _
      %p1066 = scmp.le.s32.totalorder 2, %s28
      // Predicated region
      $region93: #{tpu_custom_call.1} parent=5 // pred_check
        %p1067 = pneg %p1066
      $region94: #{tpu_custom_call.1} parent=5 // pred_check_branch
        %1069 = sbr.rel (%p1067) target = $region96
      $region95: #{tpu_custom_call.1} parent=5 // pred_region
        %s1070 = ssub.s32 %s28, 2
        // Predicated region
        $region97: #{tpu_custom_call.1} parent=95 // pred_check
          %p1071 = pneg %p303
        $region98: #{tpu_custom_call.1} parent=95 // pred_check_branch
          %1073 = sbr.rel (%p1071) target = $region100
        $region99: #{tpu_custom_call.1} parent=95 // pred_region
          %s1074 = sand.u32 %s288, 1
          %s1075 = scalar_lea.sflag [#allocation4], %s1074
          %s1076 = sand.u32 %s288, 1
          %s1077 = smul.addr %s1076, 16
          %s1078 = scalar_lea.vmem [#allocation13], %s1077
          %1080 = dma.done %s1075, 256
        $region100: #{tpu_custom_call.1} parent=95 // pred_fallthru
          _
      $region96: #{tpu_custom_call.1} parent=5 // pred_fallthru
        _
    $region6: #{tpu_custom_call.1} parent=1 // loop_footer
      %s32 = sadd.s32 1, %s28
    $region7: #{tpu_custom_call.1} parent=1 // loop_footer_branch
      %27 = sbr.rel target = $region3
    $region8: #{tpu_custom_call.1} parent=1 // loop_exit
      _
    %1081 = vsyncpa [#allocation3], 1
    %s1082 = scalar_lea.sflag [#allocation3], 1
    %1083 = vsyncpa %s1082, 1
    %1084 = vsyncpa [#allocation6], 1
    %s1085 = scalar_lea.sflag [#allocation6], 1
    %1086 = vsyncpa %s1085, 1
    %1087 = vsyncpa [#allocation9], 1
    %1088 = vsyncpa [#allocation12], 1
    %1089 = vsyncpa [#allocation4], 1
    %s1090 = scalar_lea.sflag [#allocation4], 1
    %1091 = vsyncpa %s1090, 1

</llo_original>
